<compile_context>
chip_gen: v7x
topology: tpu7x:2x2x1
jax: 0.10.0
libtpu: 0.0.40
codegen_flags: <defaults>
</compile_context>

<pallas_src>
import functools
import math

import jax
import jax.numpy as jnp
from jax.experimental import pallas as pl
from jax.experimental.pallas import tpu as pltpu


def _mlp_kernel(n_layers, act_dtype, *refs):
    """refs = (x_ref, W0, b0, ..., W_{L-1}, b_{L-1}, out_ref).

    Transposed layout: x_ref is (in_dim, tile_n), W_i is (out_i, in_i),
    b_i is (out_i, 1), out_ref is (out_dim, tile_n).  Batch is on lanes.
    """
    x_ref = refs[0]
    out_ref = refs[-1]
    wb_refs = refs[1:-1]

    h = x_ref[...].astype(jnp.float32)                      # (in_dim, tile_n)
    for i in range(n_layers):
        w = wb_refs[2 * i][...].astype(jnp.float32)         # (out_i, in_i)
        b = wb_refs[2 * i + 1][...].astype(jnp.float32)     # (out_i, 1)
        in_i = w.shape[1]
        if in_i < 8:
            # Tiny contraction (first layer, K=3): VPU broadcast multiply-adds
            # over the lane-dense batch axis; skips the MXU round trip.
            acc = w[:, 0:1] * h[0:1, :]
            for k in range(1, in_i):
                acc = acc + w[:, k:k + 1] * h[k:k + 1, :]
            h = acc + b
        else:
            h = jnp.dot(w, h, preferred_element_type=jnp.float32) + b
        if i < n_layers - 1:   # Tanh only between layers (module convention)
            if act_dtype == jnp.float32:
                h = jnp.tanh(h)
            else:
                # Optional bf16 tanh: ~2x EUP throughput on v6e/v7x.  Keep f32 on
                # v5e (no bf16 VPU/EUP) and whenever 1e-4 parity vs torch matters.
                h = jnp.tanh(h.astype(act_dtype)).astype(jnp.float32)
    out_ref[...] = h.astype(out_ref.dtype)


def pinn_mlp_forward_t(x_t, weights, biases, *, tile_n=4096, tanh_dtype=jnp.float32):
    """Feature-major fast path (zero wrapper glue).

    x_t     : (in_dim, N) float32  — features on sublanes, batch on lanes.
    weights : list of (in_i, out_i) float32  (torch-equivalent W.T)
    biases  : list of (out_i,)      float32
    returns : (out_dim, N) float32
    tile_n  : batch tile (multiple of 128).  4096 default; sweep up to 8192 on
              v6e/v7x, prefer 2048-4096 on v5e (single store slot / spill stores).
    """
    x_t = jnp.asarray(x_t, jnp.float32)
    in_dim, N = x_t.shape
    assert in_dim == weights[0].shape[0]
    assert tile_n % 128 == 0
    n_layers = len(weights)
    out_dim = weights[-1].shape[1]
    act_dtype = jnp.dtype(tanh_dtype)

    # Clamp the tile so the 'parallel' grid has >=2 steps whenever N allows it
    # (v7x has 2 TensorCores and this axis is the only cross-TC sharding here).
    tile_n = min(tile_n, max(128, 128 * (-(-N // 256))))
    n_tiles = -(-N // tile_n)   # ceil; Pallas masks the partial last block.

    # weights (in, out) -> (out, in); biases (out,) -> (out, 1) for lane broadcast.
    weights_t = [jnp.asarray(w, jnp.float32).T for w in weights]
    biases2d = [jnp.asarray(b, jnp.float32).reshape(-1, 1) for b in biases]

    kernel = functools.partial(_mlp_kernel, n_layers, act_dtype)

    in_specs = [pl.BlockSpec((in_dim, tile_n), lambda i: (0, i))]
    operands = [x_t]
    for w, b in zip(weights_t, biases2d):
        in_specs.append(pl.BlockSpec(w.shape, lambda i: (0, 0)))  # resident weights
        in_specs.append(pl.BlockSpec(b.shape, lambda i: (0, 0)))
        operands.append(w)
        operands.append(b)

    out_spec = pl.BlockSpec((out_dim, tile_n), lambda i: (0, i))  # lane-dense store

    # Advisory cost hint so XLA can overlap this call with surrounding work.
    flops = 2 * N * sum(int(w.shape[0]) * int(w.shape[1]) for w in weights)
    transcendentals = N * sum(int(w.shape[1]) for w in weights[:-1])
    bytes_accessed = 4 * (in_dim * N + out_dim * N
                          + sum(int(w.size) for w in weights_t)
                          + sum(int(b.size) for b in biases2d))

    return pl.pallas_call(
        kernel,
        out_shape=jax.ShapeDtypeStruct((out_dim, N), jnp.float32),
        grid_spec=pltpu.PrefetchScalarGridSpec(
            num_scalar_prefetch=0,
            grid=(n_tiles,),
            in_specs=in_specs,
            out_specs=out_spec,
        ),
        compiler_params=pltpu.CompilerParams(
            dimension_semantics=("parallel",),   # batch tiles independent (megacore)
        ),
        cost_estimate=pl.CostEstimate(
            flops=flops,
            transcendentals=transcendentals,
            bytes_accessed=bytes_accessed,
        ),
    )(*operands)


def semilin_heat_pinn_forward(x, weights, biases, *, tile_n=4096,
                              tanh_dtype=jnp.float32):
    """Torch-convention wrapper: x (N, 3) -> (N, out_dim).

    The two transposes here are host-side glue.  For best end-to-end performance
    keep collocation points in (3, N) layout upstream and call pinn_mlp_forward_t
    directly, consuming its (out_dim, N) output without re-transposing.
    """
    out_t = pinn_mlp_forward_t(jnp.asarray(x, jnp.float32).T, weights, biases,
                               tile_n=tile_n, tanh_dtype=tanh_dtype)
    return out_t.T


def _init_params(neurons, key):
    """Deterministic init mimicking torch.nn.Linear default (uniform +/- 1/sqrt(fan_in))."""
    weights, biases = [], []
    for i in range(len(neurons) - 1):
        fan_in, fan_out = neurons[i], neurons[i + 1]
        bound = 1.0 / math.sqrt(fan_in)
        key, kw, kb = jax.random.split(key, 3)
        w = jax.random.uniform(kw, (fan_in, fan_out), jnp.float32, -bound, bound)
        b = jax.random.uniform(kb, (fan_out,), jnp.float32, -bound, bound)
        weights.append(w)
        biases.append(b)
    return weights, biases


def _reference_forward(x, weights, biases):
    h = x
    for i, (w, b) in enumerate(zip(weights, biases)):
        h = jnp.dot(h, w, precision=jax.lax.Precision.HIGHEST) + b
        if i < len(weights) - 1:
            h = jnp.tanh(h)   # default activation=nn.Tanh() in the module
    return h


if __name__ == "__main__":
    # Module config: neurons[0] must be 3 (x1, x2, t) per the assertion in __init__.
    neurons = [3, 32, 32, 1]
    N = 2000    # NOT a multiple of the tile -> exercises the clamp + masked last block

    key = jax.random.PRNGKey(0)
    key, kx = jax.random.split(key)
    x = jax.random.uniform(kx, (N, 3), jnp.float32)  # points in [0,1]^2 x [0,T]

    weights, biases = _init_params(neurons, key)

    out = semilin_heat_pinn_forward(x, weights, biases)
    out = jax.block_until_ready(out)

    ref = _reference_forward(x, weights, biases)
    assert out.shape == (N, neurons[-1])
    max_err = float(jnp.max(jnp.abs(out - ref)))
    assert jnp.allclose(out, ref, atol=1e-4, rtol=1e-5), (
        "Pallas output mismatch, max abs err = %e" % max_err)

    # TODO(synk): loss()/test_loss() (autograd PDE residual, FEM reference solver,
    # samplers) are training scaffolding, not part of forward(), and are not ported.
    print("KERNEL_OK")
</pallas_src>

<mosaic_0001>
module attributes {stable_mosaic.version = 11 : i64} {
  func.func @_mlp_kernel(%arg0: i32, %arg1: memref<3x1024xf32, #tpu.memory_space<vmem>>, %arg2: memref<32x3xf32, #tpu.memory_space<vmem>>, %arg3: memref<32x1xf32, #tpu.memory_space<vmem>>, %arg4: memref<32x32xf32, #tpu.memory_space<vmem>>, %arg5: memref<32x1xf32, #tpu.memory_space<vmem>>, %arg6: memref<1x32xf32, #tpu.memory_space<vmem>>, %arg7: memref<1x1xf32, #tpu.memory_space<vmem>>, %arg8: memref<1x1024xf32, #tpu.memory_space<vmem>>) attributes {dimension_semantics = [#tpu.dimension_semantics<parallel>], iteration_bounds = array<i64: 2>, scalar_prefetch = 0 : i64, scratch_operands = 0 : i64, tpu.core_type = #tpu.core_type<tc>, window_params = [{transform_indices = @transform_0, window_bounds = array<i64: 3, 1024>}, {pipeline_mode = #tpu.pipeline_mode<synchronous>, transform_indices = @transform_1, window_bounds = array<i64: 32, 3>}, {pipeline_mode = #tpu.pipeline_mode<synchronous>, transform_indices = @transform_2, window_bounds = array<i64: 32, 1>}, {pipeline_mode = #tpu.pipeline_mode<synchronous>, transform_indices = @transform_3, window_bounds = array<i64: 32, 32>}, {pipeline_mode = #tpu.pipeline_mode<synchronous>, transform_indices = @transform_4, window_bounds = array<i64: 32, 1>}, {pipeline_mode = #tpu.pipeline_mode<synchronous>, transform_indices = @transform_5, window_bounds = array<i64: 1, 32>}, {pipeline_mode = #tpu.pipeline_mode<synchronous>, transform_indices = @transform_6, window_bounds = array<i64: 1, 1>}, {transform_indices = @transform_7, window_bounds = array<i64: 1, 1024>}]} {
    %c0 = arith.constant 0 : index
    %c0_0 = arith.constant 0 : index
    %0 = vector.load %arg1[%c0, %c0_0] : memref<3x1024xf32, #tpu.memory_space<vmem>>, vector<3x1024xf32>
    %c0_1 = arith.constant 0 : index
    %c0_2 = arith.constant 0 : index
    %1 = vector.load %arg2[%c0_1, %c0_2] : memref<32x3xf32, #tpu.memory_space<vmem>>, vector<32x3xf32>
    %c0_3 = arith.constant 0 : index
    %c0_4 = arith.constant 0 : index
    %2 = vector.load %arg3[%c0_3, %c0_4] : memref<32x1xf32, #tpu.memory_space<vmem>>, vector<32x1xf32>
    %3 = vector.extract_strided_slice %1 {offsets = [0, 0], sizes = [32, 1], strides = [1, 1]} : vector<32x3xf32> to vector<32x1xf32>
    %4 = vector.extract_strided_slice %0 {offsets = [0, 0], sizes = [1, 1024], strides = [1, 1]} : vector<3x1024xf32> to vector<1x1024xf32>
    %5 = vector.broadcast %3 : vector<32x1xf32> to vector<32x1024xf32>
    %6 = vector.broadcast %4 : vector<1x1024xf32> to vector<32x1024xf32>
    %7 = arith.mulf %5, %6 : vector<32x1024xf32>
    %8 = vector.extract_strided_slice %1 {offsets = [0, 1], sizes = [32, 1], strides = [1, 1]} : vector<32x3xf32> to vector<32x1xf32>
    %9 = vector.extract_strided_slice %0 {offsets = [1, 0], sizes = [1, 1024], strides = [1, 1]} : vector<3x1024xf32> to vector<1x1024xf32>
    %10 = vector.broadcast %8 : vector<32x1xf32> to vector<32x1024xf32>
    %11 = vector.broadcast %9 : vector<1x1024xf32> to vector<32x1024xf32>
    %12 = arith.mulf %10, %11 : vector<32x1024xf32>
    %13 = arith.addf %7, %12 : vector<32x1024xf32>
    %14 = vector.extract_strided_slice %1 {offsets = [0, 2], sizes = [32, 1], strides = [1, 1]} : vector<32x3xf32> to vector<32x1xf32>
    %15 = vector.extract_strided_slice %0 {offsets = [2, 0], sizes = [1, 1024], strides = [1, 1]} : vector<3x1024xf32> to vector<1x1024xf32>
    %16 = vector.broadcast %14 : vector<32x1xf32> to vector<32x1024xf32>
    %17 = vector.broadcast %15 : vector<1x1024xf32> to vector<32x1024xf32>
    %18 = arith.mulf %16, %17 : vector<32x1024xf32>
    %19 = arith.addf %13, %18 : vector<32x1024xf32>
    %20 = vector.broadcast %2 : vector<32x1xf32> to vector<32x1024xf32>
    %21 = arith.addf %19, %20 : vector<32x1024xf32>
    %22 = math.tanh %21 : vector<32x1024xf32>
    %c0_5 = arith.constant 0 : index
    %c0_6 = arith.constant 0 : index
    %23 = vector.load %arg4[%c0_5, %c0_6] : memref<32x32xf32, #tpu.memory_space<vmem>>, vector<32x32xf32>
    %c0_7 = arith.constant 0 : index
    %c0_8 = arith.constant 0 : index
    %24 = vector.load %arg5[%c0_7, %c0_8] : memref<32x1xf32, #tpu.memory_space<vmem>>, vector<32x1xf32>
    %cst = arith.constant dense<0.000000e+00> : vector<32x1024xf32>
    %25 = tpu.matmul %23, %22, %cst {dimension_numbers = #tpu.dot_dimension_numbers<[1], [0], [0], [1], [0, 0, 1, 1], [], []>} : vector<32x32xf32>, vector<32x1024xf32>, vector<32x1024xf32> -> vector<32x1024xf32>
    %26 = vector.broadcast %24 : vector<32x1xf32> to vector<32x1024xf32>
    %27 = arith.addf %25, %26 : vector<32x1024xf32>
    %28 = math.tanh %27 : vector<32x1024xf32>
    %c0_9 = arith.constant 0 : index
    %c0_10 = arith.constant 0 : index
    %29 = vector.load %arg6[%c0_9, %c0_10] : memref<1x32xf32, #tpu.memory_space<vmem>>, vector<1x32xf32>
    %c0_11 = arith.constant 0 : index
    %c0_12 = arith.constant 0 : index
    %30 = vector.load %arg7[%c0_11, %c0_12] : memref<1x1xf32, #tpu.memory_space<vmem>>, vector<1x1xf32>
    %cst_13 = arith.constant dense<0.000000e+00> : vector<1x1024xf32>
    %31 = tpu.matmul %29, %28, %cst_13 {dimension_numbers = #tpu.dot_dimension_numbers<[1], [0], [0], [1], [0, 0, 1, 1], [], []>} : vector<1x32xf32>, vector<32x1024xf32>, vector<1x1024xf32> -> vector<1x1024xf32>
    %32 = vector.broadcast %30 : vector<1x1xf32> to vector<1x1024xf32>
    %33 = arith.addf %31, %32 : vector<1x1024xf32>
    %c0_14 = arith.constant 0 : index
    %c0_15 = arith.constant 0 : index
    %34 = vector.load %arg8[%c0_14, %c0_15] : memref<1x1024xf32, #tpu.memory_space<vmem>>, vector<1x1024xf32>
    tpu.vector_store %arg8[%c0_14, %c0_15], %33 {strides = array<i32>} : memref<1x1024xf32, #tpu.memory_space<vmem>>, vector<1x1024xf32>,
    return
  }
  func.func @transform_0(%arg0: i32) -> (i32, i32) {
    %c0_i32 = arith.constant 0 : i32
    %c0_i32_0 = arith.constant 0 : i32
    return %c0_i32, %arg0 : i32, i32
  }
  func.func @transform_1(%arg0: i32) -> (i32, i32) {
    %c0_i32 = arith.constant 0 : i32
    %c0_i32_0 = arith.constant 0 : i32
    %c0_i32_1 = arith.constant 0 : i32
    return %c0_i32, %c0_i32_0 : i32, i32
  }
  func.func @transform_2(%arg0: i32) -> (i32, i32) {
    %c0_i32 = arith.constant 0 : i32
    %c0_i32_0 = arith.constant 0 : i32
    %c0_i32_1 = arith.constant 0 : i32
    return %c0_i32, %c0_i32_0 : i32, i32
  }
  func.func @transform_3(%arg0: i32) -> (i32, i32) {
    %c0_i32 = arith.constant 0 : i32
    %c0_i32_0 = arith.constant 0 : i32
    %c0_i32_1 = arith.constant 0 : i32
    return %c0_i32, %c0_i32_0 : i32, i32
  }
  func.func @transform_4(%arg0: i32) -> (i32, i32) {
    %c0_i32 = arith.constant 0 : i32
    %c0_i32_0 = arith.constant 0 : i32
    %c0_i32_1 = arith.constant 0 : i32
    return %c0_i32, %c0_i32_0 : i32, i32
  }
  func.func @transform_5(%arg0: i32) -> (i32, i32) {
    %c0_i32 = arith.constant 0 : i32
    %c0_i32_0 = arith.constant 0 : i32
    %c0_i32_1 = arith.constant 0 : i32
    return %c0_i32, %c0_i32_0 : i32, i32
  }
  func.func @transform_6(%arg0: i32) -> (i32, i32) {
    %c0_i32 = arith.constant 0 : i32
    %c0_i32_0 = arith.constant 0 : i32
    %c0_i32_1 = arith.constant 0 : i32
    return %c0_i32, %c0_i32_0 : i32, i32
  }
  func.func @transform_7(%arg0: i32) -> (i32, i32) {
    %c0_i32 = arith.constant 0 : i32
    %c0_i32_0 = arith.constant 0 : i32
    return %c0_i32, %arg0 : i32, i32
  }
}

</mosaic_0001>

<llo_original>
// kernel: tpu_custom_call.1
$region0: #{tpu_custom_call.1}
  #allocation0 [shape = 'u32[]', space=smem, size = 0x4, offset = 0x4, fixed_abs, tag = 'smem constant byte address 0x4 - core index']
  #allocation1 [shape = 'u32[144,128]{1,0:T(1,128)}', space=vmem, size = 0x12000, scoped, tag = 'internal scratch']
  #allocation2 [shape = 'f32[1,1]{1,0:T(1,128)S(1)}', space=vmem, size = 0x200, scoped, tag = 'scoped memory for tpu_custom_call.1']
  %s0 = inlined_call_operand.vmem [shape: f32[3,2000], index: 0, kind: input, shape index: {}]
  %s1 = inlined_call_operand.vmem [shape: f32[32,3], index: 1, kind: input, shape index: {}]
  %s2 = inlined_call_operand.vmem [shape: f32[32,1], index: 2, kind: input, shape index: {}]
  %s3 = inlined_call_operand.vmem [shape: f32[32,32], index: 3, kind: input, shape index: {}]
  %s4 = inlined_call_operand.vmem [shape: f32[32,1], index: 4, kind: input, shape index: {}]
  %s5 = inlined_call_operand.vmem [shape: f32[1,32], index: 5, kind: input, shape index: {}]
  %s6 = inlined_call_operand.<no memory space> [shape: f32[1,1], index: 6, kind: input, shape index: {}]
  %s7 = inlined_call_operand.hbm [shape: f32[1,2000], index: 7, kind: output, shape index: {}]
  %s8 = sld [smem:[#allocation0]]
  $region61: #{tpu_custom_call.1} parent=0
    _
  %s10 = ssub.s32 1, %s8
  %s11 = scalar_select 0, %s10, %s8
  %v12 = vstv %s6
  %13 = vst [vmem:[#allocation2] sm:$0x1] %v12
  $region1: #{tpu_custom_call.1} parent=0
    #allocation3 [shape = 'u8[8192]{0}', space=vmem, size = 0x2000, scoped, tag = 'output window, operand 0']
    #allocation4 [shape = 's32[2]{0}', space=sflag, size = 0x8, scoped, tag = 'scoped memory for tpu_custom_call.1']
    %14 = vsyncpa [#allocation4], 0
    %s15 = scalar_lea.sflag [#allocation4], 1
    %16 = vsyncpa %s15, 0
    loop: start=0, step=1, limit=4
    $region2: #{tpu_custom_call.1} parent=1 // loop_pre_header
      _
    $region3: #{tpu_custom_call.1} parent=1 // loop_header
      %s18 = sphi 0, %s22
      %p19 = scmp.ge.s32.totalorder %s18, 4
      %s28 = sphi 0, %s30
      %s31 = sphi 0, %s28
      %s32 = sphi 0, %s31
      %s48 = sphi 0, %s32
      %s52 = sphi 0, %s52
      %s54 = sphi 0, %s52
      %s55 = sphi 0, %s54
      %s69 = sphi 0, %s55
      %s73 = sphi 0, %s73
      %s75 = sphi 0, %s73
      %s76 = sphi 0, %s75
      %s90 = sphi 0, %s76
      %s94 = sphi 0, %s94
      %s96 = sphi 0, %s94
      %s97 = sphi 0, %s96
      %s111 = sphi 0, %s97
      %s115 = sphi 0, %s115
      %s117 = sphi 0, %s115
      %s118 = sphi 0, %s117
      %s132 = sphi 0, %s118
      %s136 = sphi 0, %s136
      %s138 = sphi 0, %s136
      %s139 = sphi 0, %s138
      %s153 = sphi 0, %s139
      %s157 = sphi 0, %s157
      %s159 = sphi 0, %s157
      %s160 = sphi 0, %s159
      %s174 = sphi 0, %s160
      %s180 = sphi 0, %s182
      %s183 = sphi 0, %s180
      %s184 = sphi 0, %s183
      %s200 = sphi 0, %s184
    $region4: #{tpu_custom_call.1} parent=1 // loop_header_branch
      %21 = sbr.rel (%p19) target = $region8
    $region5: #{tpu_custom_call.1} parent=1 // loop_body
      %s23 = ssub.s32 %s18, 1
      %s24 = ssub.s32 %s18, 2
      %s25 = sadd.s32 %s18, 1
      %s26 = ssub.s32 %s18, %s25
      %p27 = scmp.eq.s32.totalorder %s26, 0
      %s29 = sadd.s32 %s28, 1
      %s30 = scalar_select %p27, %s28, %s29
      %p33 = pneg %p27
      %p34 = scmp.eq.s32.totalorder %s18, 1
      %p35 = por %p33, %p34
      %p36 = scmp.ne.s32.totalorder %s28, %s31
      %p37 = scmp.eq.s32.totalorder %s18, 0
      %p38 = por %p36, %p37
      %p39 = scmp.ne.s32.totalorder %s28, %s31
      %p40 = scmp.eq.s32.totalorder %s23, 1
      %p41 = por %p39, %p40
      %p42 = scmp.ne.s32.totalorder %s31, %s32
      %p43 = scmp.eq.s32.totalorder %s23, 0
      %p44 = por %p42, %p43
      %p45 = scmp.ne.s32.totalorder %s31, %s32
      %p46 = scmp.eq.s32.totalorder %s24, 1
      %p47 = por %p45, %p46
      %p49 = scmp.ne.s32.totalorder %s32, %s48
      %p50 = scmp.eq.s32.totalorder %s24, 0
      %p51 = por %p49, %p50
      %s53 = sadd.s32 %s52, 1
      %p56 = scmp.eq.s32.totalorder %s18, 1
      %p57 = scmp.ne.s32.totalorder %s52, %s54
      %p58 = scmp.eq.s32.totalorder %s18, 0
      %p59 = por %p57, %p58
      %p60 = scmp.ne.s32.totalorder %s52, %s54
      %p61 = scmp.eq.s32.totalorder %s23, 1
      %p62 = por %p60, %p61
      %p63 = scmp.ne.s32.totalorder %s54, %s55
      %p64 = scmp.eq.s32.totalorder %s23, 0
      %p65 = por %p63, %p64
      %p66 = scmp.ne.s32.totalorder %s54, %s55
      %p67 = scmp.eq.s32.totalorder %s24, 1
      %p68 = por %p66, %p67
      %p70 = scmp.ne.s32.totalorder %s55, %s69
      %p71 = scmp.eq.s32.totalorder %s24, 0
      %p72 = por %p70, %p71
      %s74 = sadd.s32 %s73, 1
      %p77 = scmp.eq.s32.totalorder %s18, 1
      %p78 = scmp.ne.s32.totalorder %s73, %s75
      %p79 = scmp.eq.s32.totalorder %s18, 0
      %p80 = por %p78, %p79
      %p81 = scmp.ne.s32.totalorder %s73, %s75
      %p82 = scmp.eq.s32.totalorder %s23, 1
      %p83 = por %p81, %p82
      %p84 = scmp.ne.s32.totalorder %s75, %s76
      %p85 = scmp.eq.s32.totalorder %s23, 0
      %p86 = por %p84, %p85
      %p87 = scmp.ne.s32.totalorder %s75, %s76
      %p88 = scmp.eq.s32.totalorder %s24, 1
      %p89 = por %p87, %p88
      %p91 = scmp.ne.s32.totalorder %s76, %s90
      %p92 = scmp.eq.s32.totalorder %s24, 0
      %p93 = por %p91, %p92
      %s95 = sadd.s32 %s94, 1
      %p98 = scmp.eq.s32.totalorder %s18, 1
      %p99 = scmp.ne.s32.totalorder %s94, %s96
      %p100 = scmp.eq.s32.totalorder %s18, 0
      %p101 = por %p99, %p100
      %p102 = scmp.ne.s32.totalorder %s94, %s96
      %p103 = scmp.eq.s32.totalorder %s23, 1
      %p104 = por %p102, %p103
      %p105 = scmp.ne.s32.totalorder %s96, %s97
      %p106 = scmp.eq.s32.totalorder %s23, 0
      %p107 = por %p105, %p106
      %p108 = scmp.ne.s32.totalorder %s96, %s97
      %p109 = scmp.eq.s32.totalorder %s24, 1
      %p110 = por %p108, %p109
      %p112 = scmp.ne.s32.totalorder %s97, %s111
      %p113 = scmp.eq.s32.totalorder %s24, 0
      %p114 = por %p112, %p113
      %s116 = sadd.s32 %s115, 1
      %p119 = scmp.eq.s32.totalorder %s18, 1
      %p120 = scmp.ne.s32.totalorder %s115, %s117
      %p121 = scmp.eq.s32.totalorder %s18, 0
      %p122 = por %p120, %p121
      %p123 = scmp.ne.s32.totalorder %s115, %s117
      %p124 = scmp.eq.s32.totalorder %s23, 1
      %p125 = por %p123, %p124
      %p126 = scmp.ne.s32.totalorder %s117, %s118
      %p127 = scmp.eq.s32.totalorder %s23, 0
      %p128 = por %p126, %p127
      %p129 = scmp.ne.s32.totalorder %s117, %s118
      %p130 = scmp.eq.s32.totalorder %s24, 1
      %p131 = por %p129, %p130
      %p133 = scmp.ne.s32.totalorder %s118, %s132
      %p134 = scmp.eq.s32.totalorder %s24, 0
      %p135 = por %p133, %p134
      %s137 = sadd.s32 %s136, 1
      %p140 = scmp.eq.s32.totalorder %s18, 1
      %p141 = scmp.ne.s32.totalorder %s136, %s138
      %p142 = scmp.eq.s32.totalorder %s18, 0
      %p143 = por %p141, %p142
      %p144 = scmp.ne.s32.totalorder %s136, %s138
      %p145 = scmp.eq.s32.totalorder %s23, 1
      %p146 = por %p144, %p145
      %p147 = scmp.ne.s32.totalorder %s138, %s139
      %p148 = scmp.eq.s32.totalorder %s23, 0
      %p149 = por %p147, %p148
      %p150 = scmp.ne.s32.totalorder %s138, %s139
      %p151 = scmp.eq.s32.totalorder %s24, 1
      %p152 = por %p150, %p151
      %p154 = scmp.ne.s32.totalorder %s139, %s153
      %p155 = scmp.eq.s32.totalorder %s24, 0
      %p156 = por %p154, %p155
      %s158 = sadd.s32 %s157, 1
      %p161 = scmp.eq.s32.totalorder %s18, 1
      %p162 = scmp.ne.s32.totalorder %s157, %s159
      %p163 = scmp.eq.s32.totalorder %s18, 0
      %p164 = por %p162, %p163
      %p165 = scmp.ne.s32.totalorder %s157, %s159
      %p166 = scmp.eq.s32.totalorder %s23, 1
      %p167 = por %p165, %p166
      %p168 = scmp.ne.s32.totalorder %s159, %s160
      %p169 = scmp.eq.s32.totalorder %s23, 0
      %p170 = por %p168, %p169
      %p171 = scmp.ne.s32.totalorder %s159, %s160
      %p172 = scmp.eq.s32.totalorder %s24, 1
      %p173 = por %p171, %p172
      %p175 = scmp.ne.s32.totalorder %s160, %s174
      %p176 = scmp.eq.s32.totalorder %s24, 0
      %p177 = por %p175, %p176
      %s178 = ssub.s32 %s18, %s25
      %p179 = scmp.eq.s32.totalorder %s178, 0
      %s181 = sadd.s32 %s180, 1
      %s182 = scalar_select %p179, %s180, %s181
      %p185 = pneg %p179
      %p186 = scmp.eq.s32.totalorder %s18, 1
      %p187 = por %p185, %p186
      %p188 = scmp.ne.s32.totalorder %s180, %s183
      %p189 = scmp.eq.s32.totalorder %s18, 0
      %p190 = por %p188, %p189
      %p191 = scmp.ne.s32.totalorder %s180, %s183
      %p192 = scmp.eq.s32.totalorder %s23, 1
      %p193 = por %p191, %p192
      %p194 = scmp.ne.s32.totalorder %s183, %s184
      %p195 = scmp.eq.s32.totalorder %s23, 0
      %p196 = por %p194, %p195
      %p197 = scmp.ne.s32.totalorder %s183, %s184
      %p198 = scmp.eq.s32.totalorder %s24, 1
      %p199 = por %p197, %p198
      %p201 = scmp.ne.s32.totalorder %s184, %s200
      %p202 = scmp.eq.s32.totalorder %s24, 0
      %p203 = por %p201, %p202
      %p204 = scmp.le.s32.totalorder 1, %s18
      %p205 = scmp.lt.s32.totalorder %s18, 3
      %p206 = pnand %p204, %p205
      %p207 = pneg %p206
      // Predicated region
      $region9: #{tpu_custom_call.1} parent=5 // pred_check
        _
      $region10: #{tpu_custom_call.1} parent=5 // pred_check_branch
        %209 = sbr.rel (%p206) target = $region12
      $region11: #{tpu_custom_call.1} parent=5 // pred_region
        %s210 = ssub.s32 %s18, 1
        // Predicated region
        $region13: #{tpu_custom_call.1} parent=11 // pred_check
          %p211 = pneg %p65
        $region14: #{tpu_custom_call.1} parent=11 // pred_check_branch
          %213 = sbr.rel (%p211) target = $region16
        $region15: #{tpu_custom_call.1} parent=11 // pred_region
          _
        $region16: #{tpu_custom_call.1} parent=11 // pred_fallthru
          _
        // Predicated region
        $region17: #{tpu_custom_call.1} parent=11 // pred_check
          %p214 = pneg %p86
        $region18: #{tpu_custom_call.1} parent=11 // pred_check_branch
          %216 = sbr.rel (%p214) target = $region20
        $region19: #{tpu_custom_call.1} parent=11 // pred_region
          _
        $region20: #{tpu_custom_call.1} parent=11 // pred_fallthru
          _
        // Predicated region
        $region21: #{tpu_custom_call.1} parent=11 // pred_check
          %p217 = pneg %p107
        $region22: #{tpu_custom_call.1} parent=11 // pred_check_branch
          %219 = sbr.rel (%p217) target = $region24
        $region23: #{tpu_custom_call.1} parent=11 // pred_region
          _
        $region24: #{tpu_custom_call.1} parent=11 // pred_fallthru
          _
        // Predicated region
        $region25: #{tpu_custom_call.1} parent=11 // pred_check
          %p220 = pneg %p128
        $region26: #{tpu_custom_call.1} parent=11 // pred_check_branch
          %222 = sbr.rel (%p220) target = $region28
        $region27: #{tpu_custom_call.1} parent=11 // pred_region
          _
        $region28: #{tpu_custom_call.1} parent=11 // pred_fallthru
          _
        // Predicated region
        $region29: #{tpu_custom_call.1} parent=11 // pred_check
          %p223 = pneg %p149
        $region30: #{tpu_custom_call.1} parent=11 // pred_check_branch
          %225 = sbr.rel (%p223) target = $region32
        $region31: #{tpu_custom_call.1} parent=11 // pred_region
          _
        $region32: #{tpu_custom_call.1} parent=11 // pred_fallthru
          _
        // Predicated region
        $region33: #{tpu_custom_call.1} parent=11 // pred_check
          %p226 = pneg %p170
        $region34: #{tpu_custom_call.1} parent=11 // pred_check_branch
          %228 = sbr.rel (%p226) target = $region36
        $region35: #{tpu_custom_call.1} parent=11 // pred_region
          _
        $region36: #{tpu_custom_call.1} parent=11 // pred_fallthru
          _
      $region12: #{tpu_custom_call.1} parent=5 // pred_fallthru
        _
      %p229 = scmp.lt.s32.totalorder %s18, 2
      // Predicated region
      $region37: #{tpu_custom_call.1} parent=5 // pred_check
        %p230 = pneg %p229
      $region38: #{tpu_custom_call.1} parent=5 // pred_check_branch
        %232 = sbr.rel (%p230) target = $region40
      $region39: #{tpu_custom_call.1} parent=5 // pred_region
        // Predicated region
        $region41: #{tpu_custom_call.1} parent=39 // pred_check
          %p233 = pneg %p38
        $region42: #{tpu_custom_call.1} parent=39 // pred_check_branch
          %235 = sbr.rel (%p233) target = $region44
        $region43: #{tpu_custom_call.1} parent=39 // pred_region
          %s236 = smul.u32 8, %s18
          %p237 = scmp.lt.s32.totalorder %s236, 15
          %s238 = scalar_select %p237, %s236, 15
          %s239 = smul.addr %s238, 4
          %s240 = scalar_lea.vmem %s0, %s239
          %s241 = smul.u32 8, %s18
        $region44: #{tpu_custom_call.1} parent=39 // pred_fallthru
          _
      $region40: #{tpu_custom_call.1} parent=5 // pred_fallthru
        _
      %p242 = scmp.le.s32.totalorder 1, %s18
      %p243 = scmp.lt.s32.totalorder %s18, 3
      %p244 = pnand %p242, %p243
      %p245 = pneg %p244
      // Predicated region
      $region45: #{tpu_custom_call.1} parent=5 // pred_check
        _
      $region46: #{tpu_custom_call.1} parent=5 // pred_check_branch
        %247 = sbr.rel (%p244) target = $region48
      $region47: #{tpu_custom_call.1} parent=5 // pred_region
        %s248 = ssub.s32 %s18, 1
        %s249 = smul.u32 8, %s23
        %p250 = scmp.lt.s32.totalorder %s249, 15
        %s251 = scalar_select %p250, %s249, 15
        %s252 = smul.addr %s251, 4
        %s253 = scalar_lea.vmem %s0, %s252
        %p254 = pneg %p44
        %p255 = pneg %p41
        %p256 = pneg %p65
        %p257 = pneg %p62
        %p258 = pneg %p86
        %p259 = pneg %p83
        %p260 = pneg %p107
        %p261 = pneg %p104
        %p262 = pneg %p128
        %p263 = pneg %p125
        %p264 = pneg %p149
        %p265 = pneg %p146
        %p266 = pneg %p170
        %p267 = pneg %p167
        %p268 = pneg %p196
        %p269 = pneg %p193
        %s270 = sand.u32 %s183, 1
        %s271 = scalar_lea.sflag [#allocation4], %s270
        %s272 = sand.u32 %s183, 1
        %s273 = smul.addr %s272, 8
        %s274 = scalar_lea.vmem [#allocation3], %s273
        %s275 = smul.u32 8, %s23
        %p276 = scmp.lt.s32.totalorder %s275, 15
        %s277 = scalar_select %p276, %s275, 15
        %s278 = smul.addr %s277, 4
        %s279 = scalar_lea.vmem %s0, %s278
        %s280 = smul.u32 8, %s23
        %s281 = smul.u32 8, %s23
        %v282 = vld [vmem:[%s279] sm:$0x77]
        %v283 = vld [vmem:[%s279 + $0x8] sm:$0x77]
        %v284 = vld [vmem:[%s279 + $0x10] sm:$0x77]
        %v285 = vld [vmem:[%s279 + $0x18] sm:$0x77]
        %v286 = vld [vmem:[%s1] sm:$0xff]
        %v287 = vld [vmem:[%s1 + $0x8] sm:$0xff]
        %v288 = vld [vmem:[%s1 + $0x10] sm:$0xff]
        %v289 = vld [vmem:[%s1 + $0x18] sm:$0xff]
        %v290 = vld [vmem:[%s2] sm:$0xff]
        %v291 = vld [vmem:[%s2 + $0x8] sm:$0xff]
        %v292 = vld [vmem:[%s2 + $0x10] sm:$0xff]
        %v293 = vld [vmem:[%s2 + $0x18] sm:$0xff]
        %295 = vset.pattern.permute.xlu0 0
        %296 = vperm.xlu0 %295, %v286
        %v297 = vpop.permute.xlu0 %296
        %300 = vset.pattern.permute.xlu0 0
        %301 = vperm.xlu0 %300, %v287
        %v302 = vpop.permute.xlu0 %301
        %305 = vset.pattern.permute.xlu0 0
        %306 = vperm.xlu0 %305, %v288
        %v307 = vpop.permute.xlu0 %306
        %310 = vset.pattern.permute.xlu0 0
        %311 = vperm.xlu0 %310, %v289
        %v312 = vpop.permute.xlu0 %311
        %v318 = vlaneseq
        %v319 = vshrl.u32 %v318, 7
        %v320 = vsub.s32 0, %v319
        %v321 = vrot.slane %v282, %v320
        %v322 = vlaneseq
        %v323 = vshrl.u32 %v322, 7
        %v324 = vsub.s32 4, %v323
        %v325 = vrot.slane %v282, %v324
        %v326 = vlaneseq
        %v327 = vshrl.u32 %v326, 7
        %v328 = vsub.s32 0, %v327
        %v329 = vrot.slane %v283, %v328
        %v330 = vlaneseq
        %v331 = vshrl.u32 %v330, 7
        %v332 = vsub.s32 4, %v331
        %v333 = vrot.slane %v283, %v332
        %v334 = vlaneseq
        %v335 = vshrl.u32 %v334, 7
        %v336 = vsub.s32 0, %v335
        %v337 = vrot.slane %v284, %v336
        %v338 = vlaneseq
        %v339 = vshrl.u32 %v338, 7
        %v340 = vsub.s32 4, %v339
        %v341 = vrot.slane %v284, %v340
        %v342 = vlaneseq
        %v343 = vshrl.u32 %v342, 7
        %v344 = vsub.s32 0, %v343
        %v345 = vrot.slane %v285, %v344
        %v346 = vlaneseq
        %v347 = vshrl.u32 %v346, 7
        %v348 = vsub.s32 4, %v347
        %v349 = vrot.slane %v285, %v348
        %v358 = vlaneseq
        %v359 = vshrl.u32 %v358, 7
        %v360 = vsub.s32 0, %v359
        %v361 = vrot.slane %v321, %v360
        %v362 = vlaneseq
        %v363 = vshrl.u32 %v362, 7
        %v364 = vsub.s32 0, %v363
        %v365 = vrot.slane %v325, %v364
        %v366 = vlaneseq
        %v367 = vshrl.u32 %v366, 7
        %v368 = vsub.s32 0, %v367
        %v369 = vrot.slane %v329, %v368
        %v370 = vlaneseq
        %v371 = vshrl.u32 %v370, 7
        %v372 = vsub.s32 0, %v371
        %v373 = vrot.slane %v333, %v372
        %v374 = vlaneseq
        %v375 = vshrl.u32 %v374, 7
        %v376 = vsub.s32 0, %v375
        %v377 = vrot.slane %v337, %v376
        %v378 = vlaneseq
        %v379 = vshrl.u32 %v378, 7
        %v380 = vsub.s32 0, %v379
        %v381 = vrot.slane %v341, %v380
        %v382 = vlaneseq
        %v383 = vshrl.u32 %v382, 7
        %v384 = vsub.s32 0, %v383
        %v385 = vrot.slane %v345, %v384
        %v386 = vlaneseq
        %v387 = vshrl.u32 %v386, 7
        %v388 = vsub.s32 0, %v387
        %v389 = vrot.slane %v349, %v388
        %v390 = vmul.f32 %v297, %v361
        %v391 = vmul.f32 %v297, %v365
        %v392 = vmul.f32 %v297, %v369
        %v393 = vmul.f32 %v297, %v373
        %v394 = vmul.f32 %v297, %v377
        %v395 = vmul.f32 %v297, %v381
        %v396 = vmul.f32 %v297, %v385
        %v397 = vmul.f32 %v297, %v389
        %v398 = vmul.f32 %v302, %v361
        %v399 = vmul.f32 %v302, %v365
        %v400 = vmul.f32 %v302, %v369
        %v401 = vmul.f32 %v302, %v373
        %v402 = vmul.f32 %v302, %v377
        %v403 = vmul.f32 %v302, %v381
        %v404 = vmul.f32 %v302, %v385
        %v405 = vmul.f32 %v302, %v389
        %v406 = vmul.f32 %v307, %v361
        %v407 = vmul.f32 %v307, %v365
        %v408 = vmul.f32 %v307, %v369
        %v409 = vmul.f32 %v307, %v373
        %v410 = vmul.f32 %v307, %v377
        %v411 = vmul.f32 %v307, %v381
        %v412 = vmul.f32 %v307, %v385
        %v413 = vmul.f32 %v307, %v389
        %v414 = vmul.f32 %v312, %v361
        %v415 = vmul.f32 %v312, %v365
        %v416 = vmul.f32 %v312, %v369
        %v417 = vmul.f32 %v312, %v373
        %v418 = vmul.f32 %v312, %v377
        %v419 = vmul.f32 %v312, %v381
        %v420 = vmul.f32 %v312, %v385
        %v421 = vmul.f32 %v312, %v389
        %422 = vset.pattern.permute.xlu0 1
        %423 = vperm.xlu0 %422, %v286
        %v424 = vpop.permute.xlu0 %423
        %426 = vset.pattern.permute.xlu0 1
        %427 = vperm.xlu0 %426, %v287
        %v428 = vpop.permute.xlu0 %427
        %430 = vset.pattern.permute.xlu0 1
        %431 = vperm.xlu0 %430, %v288
        %v432 = vpop.permute.xlu0 %431
        %434 = vset.pattern.permute.xlu0 1
        %435 = vperm.xlu0 %434, %v289
        %v436 = vpop.permute.xlu0 %435
        %v438 = vlaneseq
        %v439 = vshrl.u32 %v438, 7
        %v440 = vsub.s32 1, %v439
        %v441 = vrot.slane %v282, %v440
        %v442 = vlaneseq
        %v443 = vshrl.u32 %v442, 7
        %v444 = vsub.s32 5, %v443
        %v445 = vrot.slane %v282, %v444
        %v446 = vlaneseq
        %v447 = vshrl.u32 %v446, 7
        %v448 = vsub.s32 1, %v447
        %v449 = vrot.slane %v283, %v448
        %v450 = vlaneseq
        %v451 = vshrl.u32 %v450, 7
        %v452 = vsub.s32 5, %v451
        %v453 = vrot.slane %v283, %v452
        %v454 = vlaneseq
        %v455 = vshrl.u32 %v454, 7
        %v456 = vsub.s32 1, %v455
        %v457 = vrot.slane %v284, %v456
        %v458 = vlaneseq
        %v459 = vshrl.u32 %v458, 7
        %v460 = vsub.s32 5, %v459
        %v461 = vrot.slane %v284, %v460
        %v462 = vlaneseq
        %v463 = vshrl.u32 %v462, 7
        %v464 = vsub.s32 1, %v463
        %v465 = vrot.slane %v285, %v464
        %v466 = vlaneseq
        %v467 = vshrl.u32 %v466, 7
        %v468 = vsub.s32 5, %v467
        %v469 = vrot.slane %v285, %v468
        %v478 = vlaneseq
        %v479 = vshrl.u32 %v478, 7
        %v480 = vsub.s32 1, %v479
        %v481 = vrot.slane %v441, %v480
        %v482 = vlaneseq
        %v483 = vshrl.u32 %v482, 7
        %v484 = vsub.s32 1, %v483
        %v485 = vrot.slane %v445, %v484
        %v486 = vlaneseq
        %v487 = vshrl.u32 %v486, 7
        %v488 = vsub.s32 1, %v487
        %v489 = vrot.slane %v449, %v488
        %v490 = vlaneseq
        %v491 = vshrl.u32 %v490, 7
        %v492 = vsub.s32 1, %v491
        %v493 = vrot.slane %v453, %v492
        %v494 = vlaneseq
        %v495 = vshrl.u32 %v494, 7
        %v496 = vsub.s32 1, %v495
        %v497 = vrot.slane %v457, %v496
        %v498 = vlaneseq
        %v499 = vshrl.u32 %v498, 7
        %v500 = vsub.s32 1, %v499
        %v501 = vrot.slane %v461, %v500
        %v502 = vlaneseq
        %v503 = vshrl.u32 %v502, 7
        %v504 = vsub.s32 1, %v503
        %v505 = vrot.slane %v465, %v504
        %v506 = vlaneseq
        %v507 = vshrl.u32 %v506, 7
        %v508 = vsub.s32 1, %v507
        %v509 = vrot.slane %v469, %v508
        %v510 = vmul.f32 %v424, %v481
        %v511 = vmul.f32 %v424, %v485
        %v512 = vmul.f32 %v424, %v489
        %v513 = vmul.f32 %v424, %v493
        %v514 = vmul.f32 %v424, %v497
        %v515 = vmul.f32 %v424, %v501
        %v516 = vmul.f32 %v424, %v505
        %v517 = vmul.f32 %v424, %v509
        %v518 = vmul.f32 %v428, %v481
        %v519 = vmul.f32 %v428, %v485
        %v520 = vmul.f32 %v428, %v489
        %v521 = vmul.f32 %v428, %v493
        %v522 = vmul.f32 %v428, %v497
        %v523 = vmul.f32 %v428, %v501
        %v524 = vmul.f32 %v428, %v505
        %v525 = vmul.f32 %v428, %v509
        %v526 = vmul.f32 %v432, %v481
        %v527 = vmul.f32 %v432, %v485
        %v528 = vmul.f32 %v432, %v489
        %v529 = vmul.f32 %v432, %v493
        %v530 = vmul.f32 %v432, %v497
        %v531 = vmul.f32 %v432, %v501
        %v532 = vmul.f32 %v432, %v505
        %v533 = vmul.f32 %v432, %v509
        %v534 = vmul.f32 %v436, %v481
        %v535 = vmul.f32 %v436, %v485
        %v536 = vmul.f32 %v436, %v489
        %v537 = vmul.f32 %v436, %v493
        %v538 = vmul.f32 %v436, %v497
        %v539 = vmul.f32 %v436, %v501
        %v540 = vmul.f32 %v436, %v505
        %v541 = vmul.f32 %v436, %v509
        %v542 = vadd.f32 %v390, %v510
        %v543 = vadd.f32 %v391, %v511
        %v544 = vadd.f32 %v392, %v512
        %v545 = vadd.f32 %v393, %v513
        %v546 = vadd.f32 %v394, %v514
        %v547 = vadd.f32 %v395, %v515
        %v548 = vadd.f32 %v396, %v516
        %v549 = vadd.f32 %v397, %v517
        %v550 = vadd.f32 %v398, %v518
        %v551 = vadd.f32 %v399, %v519
        %v552 = vadd.f32 %v400, %v520
        %v553 = vadd.f32 %v401, %v521
        %v554 = vadd.f32 %v402, %v522
        %v555 = vadd.f32 %v403, %v523
        %v556 = vadd.f32 %v404, %v524
        %v557 = vadd.f32 %v405, %v525
        %v558 = vadd.f32 %v406, %v526
        %v559 = vadd.f32 %v407, %v527
        %v560 = vadd.f32 %v408, %v528
        %v561 = vadd.f32 %v409, %v529
        %v562 = vadd.f32 %v410, %v530
        %v563 = vadd.f32 %v411, %v531
        %v564 = vadd.f32 %v412, %v532
        %v565 = vadd.f32 %v413, %v533
        %v566 = vadd.f32 %v414, %v534
        %v567 = vadd.f32 %v415, %v535
        %v568 = vadd.f32 %v416, %v536
        %v569 = vadd.f32 %v417, %v537
        %v570 = vadd.f32 %v418, %v538
        %v571 = vadd.f32 %v419, %v539
        %v572 = vadd.f32 %v420, %v540
        %v573 = vadd.f32 %v421, %v541
        %574 = vset.pattern.permute.xlu0 2
        %575 = vperm.xlu0 %574, %v286
        %v576 = vpop.permute.xlu0 %575
        %578 = vset.pattern.permute.xlu0 2
        %579 = vperm.xlu0 %578, %v287
        %v580 = vpop.permute.xlu0 %579
        %582 = vset.pattern.permute.xlu0 2
        %583 = vperm.xlu0 %582, %v288
        %v584 = vpop.permute.xlu0 %583
        %586 = vset.pattern.permute.xlu0 2
        %587 = vperm.xlu0 %586, %v289
        %v588 = vpop.permute.xlu0 %587
        %v590 = vlaneseq
        %v591 = vshrl.u32 %v590, 7
        %v592 = vsub.s32 2, %v591
        %v593 = vrot.slane %v282, %v592
        %v594 = vlaneseq
        %v595 = vshrl.u32 %v594, 7
        %v596 = vsub.s32 6, %v595
        %v597 = vrot.slane %v282, %v596
        %v598 = vlaneseq
        %v599 = vshrl.u32 %v598, 7
        %v600 = vsub.s32 2, %v599
        %v601 = vrot.slane %v283, %v600
        %v602 = vlaneseq
        %v603 = vshrl.u32 %v602, 7
        %v604 = vsub.s32 6, %v603
        %v605 = vrot.slane %v283, %v604
        %v606 = vlaneseq
        %v607 = vshrl.u32 %v606, 7
        %v608 = vsub.s32 2, %v607
        %v609 = vrot.slane %v284, %v608
        %v610 = vlaneseq
        %v611 = vshrl.u32 %v610, 7
        %v612 = vsub.s32 6, %v611
        %v613 = vrot.slane %v284, %v612
        %v614 = vlaneseq
        %v615 = vshrl.u32 %v614, 7
        %v616 = vsub.s32 2, %v615
        %v617 = vrot.slane %v285, %v616
        %v618 = vlaneseq
        %v619 = vshrl.u32 %v618, 7
        %v620 = vsub.s32 6, %v619
        %v621 = vrot.slane %v285, %v620
        %v630 = vlaneseq
        %v631 = vshrl.u32 %v630, 7
        %v632 = vsub.s32 2, %v631
        %v633 = vrot.slane %v593, %v632
        %v634 = vlaneseq
        %v635 = vshrl.u32 %v634, 7
        %v636 = vsub.s32 2, %v635
        %v637 = vrot.slane %v597, %v636
        %v638 = vlaneseq
        %v639 = vshrl.u32 %v638, 7
        %v640 = vsub.s32 2, %v639
        %v641 = vrot.slane %v601, %v640
        %v642 = vlaneseq
        %v643 = vshrl.u32 %v642, 7
        %v644 = vsub.s32 2, %v643
        %v645 = vrot.slane %v605, %v644
        %v646 = vlaneseq
        %v647 = vshrl.u32 %v646, 7
        %v648 = vsub.s32 2, %v647
        %v649 = vrot.slane %v609, %v648
        %v650 = vlaneseq
        %v651 = vshrl.u32 %v650, 7
        %v652 = vsub.s32 2, %v651
        %v653 = vrot.slane %v613, %v652
        %v654 = vlaneseq
        %v655 = vshrl.u32 %v654, 7
        %v656 = vsub.s32 2, %v655
        %v657 = vrot.slane %v617, %v656
        %v658 = vlaneseq
        %v659 = vshrl.u32 %v658, 7
        %v660 = vsub.s32 2, %v659
        %v661 = vrot.slane %v621, %v660
        %v662 = vmul.f32 %v576, %v633
        %v663 = vmul.f32 %v576, %v637
        %v664 = vmul.f32 %v576, %v641
        %v665 = vmul.f32 %v576, %v645
        %v666 = vmul.f32 %v576, %v649
        %v667 = vmul.f32 %v576, %v653
        %v668 = vmul.f32 %v576, %v657
        %v669 = vmul.f32 %v576, %v661
        %v670 = vmul.f32 %v580, %v633
        %v671 = vmul.f32 %v580, %v637
        %v672 = vmul.f32 %v580, %v641
        %v673 = vmul.f32 %v580, %v645
        %v674 = vmul.f32 %v580, %v649
        %v675 = vmul.f32 %v580, %v653
        %v676 = vmul.f32 %v580, %v657
        %v677 = vmul.f32 %v580, %v661
        %v678 = vmul.f32 %v584, %v633
        %v679 = vmul.f32 %v584, %v637
        %v680 = vmul.f32 %v584, %v641
        %v681 = vmul.f32 %v584, %v645
        %v682 = vmul.f32 %v584, %v649
        %v683 = vmul.f32 %v584, %v653
        %v684 = vmul.f32 %v584, %v657
        %v685 = vmul.f32 %v584, %v661
        %v686 = vmul.f32 %v588, %v633
        %v687 = vmul.f32 %v588, %v637
        %v688 = vmul.f32 %v588, %v641
        %v689 = vmul.f32 %v588, %v645
        %v690 = vmul.f32 %v588, %v649
        %v691 = vmul.f32 %v588, %v653
        %v692 = vmul.f32 %v588, %v657
        %v693 = vmul.f32 %v588, %v661
        %v694 = vadd.f32 %v542, %v662
        %v695 = vadd.f32 %v543, %v663
        %v696 = vadd.f32 %v544, %v664
        %v697 = vadd.f32 %v545, %v665
        %v698 = vadd.f32 %v546, %v666
        %v699 = vadd.f32 %v547, %v667
        %v700 = vadd.f32 %v548, %v668
        %v701 = vadd.f32 %v549, %v669
        %v702 = vadd.f32 %v550, %v670
        %v703 = vadd.f32 %v551, %v671
        %v704 = vadd.f32 %v552, %v672
        %v705 = vadd.f32 %v553, %v673
        %v706 = vadd.f32 %v554, %v674
        %v707 = vadd.f32 %v555, %v675
        %v708 = vadd.f32 %v556, %v676
        %v709 = vadd.f32 %v557, %v677
        %v710 = vadd.f32 %v558, %v678
        %v711 = vadd.f32 %v559, %v679
        %v712 = vadd.f32 %v560, %v680
        %v713 = vadd.f32 %v561, %v681
        %v714 = vadd.f32 %v562, %v682
        %v715 = vadd.f32 %v563, %v683
        %v716 = vadd.f32 %v564, %v684
        %v717 = vadd.f32 %v565, %v685
        %v718 = vadd.f32 %v566, %v686
        %v719 = vadd.f32 %v567, %v687
        %v720 = vadd.f32 %v568, %v688
        %v721 = vadd.f32 %v569, %v689
        %v722 = vadd.f32 %v570, %v690
        %v723 = vadd.f32 %v571, %v691
        %v724 = vadd.f32 %v572, %v692
        %v725 = vadd.f32 %v573, %v693
        %727 = vset.pattern.permute.xlu0 0
        %728 = vperm.xlu0 %727, %v290
        %v729 = vpop.permute.xlu0 %728
        %732 = vset.pattern.permute.xlu0 0
        %733 = vperm.xlu0 %732, %v291
        %v734 = vpop.permute.xlu0 %733
        %737 = vset.pattern.permute.xlu0 0
        %738 = vperm.xlu0 %737, %v292
        %v739 = vpop.permute.xlu0 %738
        %742 = vset.pattern.permute.xlu0 0
        %743 = vperm.xlu0 %742, %v293
        %v744 = vpop.permute.xlu0 %743
        %v746 = vadd.f32 %v694, %v729
        %v747 = vadd.f32 %v695, %v729
        %v748 = vadd.f32 %v696, %v729
        %v749 = vadd.f32 %v697, %v729
        %v750 = vadd.f32 %v698, %v729
        %v751 = vadd.f32 %v699, %v729
        %v752 = vadd.f32 %v700, %v729
        %v753 = vadd.f32 %v701, %v729
        %v754 = vadd.f32 %v702, %v734
        %v755 = vadd.f32 %v703, %v734
        %v756 = vadd.f32 %v704, %v734
        %v757 = vadd.f32 %v705, %v734
        %v758 = vadd.f32 %v706, %v734
        %v759 = vadd.f32 %v707, %v734
        %v760 = vadd.f32 %v708, %v734
        %v761 = vadd.f32 %v709, %v734
        %v762 = vadd.f32 %v710, %v739
        %v763 = vadd.f32 %v711, %v739
        %v764 = vadd.f32 %v712, %v739
        %v765 = vadd.f32 %v713, %v739
        %v766 = vadd.f32 %v714, %v739
        %v767 = vadd.f32 %v715, %v739
        %v768 = vadd.f32 %v716, %v739
        %v769 = vadd.f32 %v717, %v739
        %v770 = vadd.f32 %v718, %v744
        %v771 = vadd.f32 %v719, %v744
        %v772 = vadd.f32 %v720, %v744
        %v773 = vadd.f32 %v721, %v744
        %v774 = vadd.f32 %v722, %v744
        %v775 = vadd.f32 %v723, %v744
        %v776 = vadd.f32 %v724, %v744
        %v777 = vadd.f32 %v725, %v744
        %v778 = vtanh.pop %v746
        %v779 = vtanh.pop %v747
        %v780 = vtanh.pop %v748
        %v781 = vtanh.pop %v749
        %v782 = vtanh.pop %v750
        %v783 = vtanh.pop %v751
        %v784 = vtanh.pop %v752
        %v785 = vtanh.pop %v753
        %v786 = vtanh.pop %v754
        %v787 = vtanh.pop %v755
        %v788 = vtanh.pop %v756
        %v789 = vtanh.pop %v757
        %v790 = vtanh.pop %v758
        %v791 = vtanh.pop %v759
        %v792 = vtanh.pop %v760
        %v793 = vtanh.pop %v761
        %v794 = vtanh.pop %v762
        %v795 = vtanh.pop %v763
        %v796 = vtanh.pop %v764
        %v797 = vtanh.pop %v765
        %v798 = vtanh.pop %v766
        %v799 = vtanh.pop %v767
        %v800 = vtanh.pop %v768
        %v801 = vtanh.pop %v769
        %v802 = vtanh.pop %v770
        %v803 = vtanh.pop %v771
        %v804 = vtanh.pop %v772
        %v805 = vtanh.pop %v773
        %v806 = vtanh.pop %v774
        %v807 = vtanh.pop %v775
        %v808 = vtanh.pop %v776
        %v809 = vtanh.pop %v777
        %v810 = vld [vmem:[%s3] sm:$0xff]
        %v811 = vld [vmem:[%s3 + $0x8] sm:$0xff]
        %v812 = vld [vmem:[%s3 + $0x10] sm:$0xff]
        %v813 = vld [vmem:[%s3 + $0x18] sm:$0xff]
        %v814 = vld [vmem:[%s4] sm:$0xff]
        %v815 = vld [vmem:[%s4 + $0x8] sm:$0xff]
        %v816 = vld [vmem:[%s4 + $0x10] sm:$0xff]
        %v817 = vld [vmem:[%s4 + $0x18] sm:$0xff]
        %819 = vset.pattern.permute.xlu0 0
        %820 = vperm.xlu0 %819, %v814
        %v821 = vpop.permute.xlu0 %820
        %824 = vset.pattern.permute.xlu0 0
        %825 = vperm.xlu0 %824, %v815
        %v826 = vpop.permute.xlu0 %825
        %829 = vset.pattern.permute.xlu0 0
        %830 = vperm.xlu0 %829, %v816
        %v831 = vpop.permute.xlu0 %830
        %834 = vset.pattern.permute.xlu0 0
        %835 = vperm.xlu0 %834, %v817
        %v836 = vpop.permute.xlu0 %835
        %vm838 = vcmask 261120
        %v840 = vsel %vm838, %v810, 0
        %v843 = vsel %vm838, %v811, 0
        %v846 = vsel %vm838, %v812, 0
        %v849 = vsel %vm838, %v813, 0
        %851 = vmatprep.subr.mxu0 %v779
        %852 = vmatpush1.msra.mxu0 %v778
        %853 = vmatprep.subr.mxu0 %v787
        %854 = vmatpush1.msra.mxu0 %v786
        %855 = vmatprep.subr.mxu0 %v795
        %856 = vmatpush1.msra.mxu0 %v794
        %857 = vmatprep.subr.mxu0 %v803
        %858 = vmatpush1.msra.mxu0 %v802
        %859 = vmatprep.subr.mxu0 0.0
        %860 = vmatpush1.msra.mxu0 0.0
        %861 = vmatprep.subr.mxu0 0.0
        %862 = vmatpush1.msra.mxu0 0.0
        %863 = vmatprep.subr.mxu0 0.0
        %864 = vmatpush1.msra.mxu0 0.0
        %865 = vmatprep.subr.mxu0 0.0
        %866 = vmatpush1.msra.mxu0 0.0
        %867 = vmatprep.subr.mxu0 0.0
        %868 = vmatpush1.msra.mxu0 0.0
        %869 = vmatprep.subr.mxu0 0.0
        %870 = vmatpush1.msra.mxu0 0.0
        %871 = vmatprep.subr.mxu0 0.0
        %872 = vmatpush1.msra.mxu0 0.0
        %873 = vmatprep.subr.mxu0 0.0
        %874 = vmatpush1.msra.mxu0 0.0
        %875 = vmatprep.subr.mxu0 0.0
        %876 = vmatpush1.msra.mxu0 0.0
        %877 = vmatprep.subr.mxu0 0.0
        %878 = vmatpush1.msra.mxu0 0.0
        %879 = vmatprep.subr.mxu0 0.0
        %880 = vmatpush1.msra.mxu0 0.0
        %881 = vmatprep.subr.mxu0 0.0
        %882 = vmatpush1.msra.mxu0 0.0
        %883 = vmatprep.subr.mxu0 0.0
        %884 = vmatpush1.msra.mxu0 0.0
        %885 = vmatprep.subr.mxu0 0.0
        %886 = vmatpush1.msra.mxu0 0.0
        %887 = vmatprep.subr.mxu0 0.0
        %888 = vmatpush1.msra.mxu0 0.0
        %889 = vmatprep.subr.mxu0 0.0
        %890 = vmatpush1.msra.mxu0 0.0
        %891 = vmatprep.subr.mxu0 0.0
        %892 = vmatpush1.msra.mxu0 0.0
        %893 = vmatprep.subr.mxu0 0.0
        %894 = vmatpush1.msra.mxu0 0.0
        %895 = vmatprep.subr.mxu0 0.0
        %896 = vmatpush1.msra.mxu0 0.0
        %897 = vmatprep.subr.mxu0 0.0
        %898 = vmatpush1.msra.mxu0 0.0
        %899 = vmatprep.subr.mxu0 0.0
        %900 = vmatpush1.msra.mxu0 0.0
        %901 = vmatprep.subr.mxu0 0.0
        %902 = vmatpush1.msra.mxu0 0.0
        %903 = vmatprep.subr.mxu0 0.0
        %904 = vmatpush1.msra.mxu0 0.0
        %905 = vmatprep.subr.mxu0 0.0
        %906 = vmatpush1.msra.mxu0 0.0
        %907 = vmatprep.subr.mxu0 0.0
        %908 = vmatpush1.msra.mxu0 0.0
        %909 = vmatprep.subr.mxu0 0.0
        %910 = vmatpush1.msra.mxu0 0.0
        %911 = vmatprep.subr.mxu0 0.0
        %912 = vmatpush1.msra.mxu0 0.0
        %913 = vmatprep.subr.mxu0 0.0
        %914 = vmatpush1.msra.mxu0 0.0
        %915 = vmatprep.mubr.f32.mxu0 0.0
        %916 = vmatmul.mubr.f32.gmra.mrb[0].mxu0 %v840
        %v917 = vpop.f32.mrb[0].mxu0
        %v918 = vadd.f32 %v821, %v917
        %v919 = vpop.f32.mrb[0].mxu0
        %v920 = vadd.f32 %v821, %v919
        %921 = vmatprep.mubr.f32.mxu0 0.0
        %922 = vmatmul.mubr.f32.gmra.mrb[0].mxu0 %v843
        %v923 = vpop.f32.mrb[0].mxu0
        %v924 = vadd.f32 %v826, %v923
        %v925 = vpop.f32.mrb[0].mxu0
        %v926 = vadd.f32 %v826, %v925
        %927 = vmatprep.mubr.f32.mxu0 0.0
        %928 = vmatmul.mubr.f32.gmra.mrb[0].mxu0 %v846
        %v929 = vpop.f32.mrb[0].mxu0
        %v930 = vadd.f32 %v831, %v929
        %v931 = vpop.f32.mrb[0].mxu0
        %v932 = vadd.f32 %v831, %v931
        %933 = vmatprep.mubr.f32.mxu0 0.0
        %934 = vmatmul.mubr.f32.gmra.mrb[0].mxu0 %v849
        %v935 = vpop.f32.mrb[0].mxu0
        %v936 = vadd.f32 %v836, %v935
        %v937 = vpop.f32.mrb[0].mxu0
        %v938 = vadd.f32 %v836, %v937
        %939 = vdwg.mxu0
        %940 = vmatprep.subr.mxu0 %v781
        %941 = vmatpush1.msra.mxu0 %v780
        %942 = vmatprep.subr.mxu0 %v789
        %943 = vmatpush1.msra.mxu0 %v788
        %944 = vmatprep.subr.mxu0 %v797
        %945 = vmatpush1.msra.mxu0 %v796
        %946 = vmatprep.subr.mxu0 %v805
        %947 = vmatpush1.msra.mxu0 %v804
        %948 = vmatprep.subr.mxu0 0.0
        %949 = vmatpush1.msra.mxu0 0.0
        %950 = vmatprep.subr.mxu0 0.0
        %951 = vmatpush1.msra.mxu0 0.0
        %952 = vmatprep.subr.mxu0 0.0
        %953 = vmatpush1.msra.mxu0 0.0
        %954 = vmatprep.subr.mxu0 0.0
        %955 = vmatpush1.msra.mxu0 0.0
        %956 = vmatprep.subr.mxu0 0.0
        %957 = vmatpush1.msra.mxu0 0.0
        %958 = vmatprep.subr.mxu0 0.0
        %959 = vmatpush1.msra.mxu0 0.0
        %960 = vmatprep.subr.mxu0 0.0
        %961 = vmatpush1.msra.mxu0 0.0
        %962 = vmatprep.subr.mxu0 0.0
        %963 = vmatpush1.msra.mxu0 0.0
        %964 = vmatprep.subr.mxu0 0.0
        %965 = vmatpush1.msra.mxu0 0.0
        %966 = vmatprep.subr.mxu0 0.0
        %967 = vmatpush1.msra.mxu0 0.0
        %968 = vmatprep.subr.mxu0 0.0
        %969 = vmatpush1.msra.mxu0 0.0
        %970 = vmatprep.subr.mxu0 0.0
        %971 = vmatpush1.msra.mxu0 0.0
        %972 = vmatprep.subr.mxu0 0.0
        %973 = vmatpush1.msra.mxu0 0.0
        %974 = vmatprep.subr.mxu0 0.0
        %975 = vmatpush1.msra.mxu0 0.0
        %976 = vmatprep.subr.mxu0 0.0
        %977 = vmatpush1.msra.mxu0 0.0
        %978 = vmatprep.subr.mxu0 0.0
        %979 = vmatpush1.msra.mxu0 0.0
        %980 = vmatprep.subr.mxu0 0.0
        %981 = vmatpush1.msra.mxu0 0.0
        %982 = vmatprep.subr.mxu0 0.0
        %983 = vmatpush1.msra.mxu0 0.0
        %984 = vmatprep.subr.mxu0 0.0
        %985 = vmatpush1.msra.mxu0 0.0
        %986 = vmatprep.subr.mxu0 0.0
        %987 = vmatpush1.msra.mxu0 0.0
        %988 = vmatprep.subr.mxu0 0.0
        %989 = vmatpush1.msra.mxu0 0.0
        %990 = vmatprep.subr.mxu0 0.0
        %991 = vmatpush1.msra.mxu0 0.0
        %992 = vmatprep.subr.mxu0 0.0
        %993 = vmatpush1.msra.mxu0 0.0
        %994 = vmatprep.subr.mxu0 0.0
        %995 = vmatpush1.msra.mxu0 0.0
        %996 = vmatprep.subr.mxu0 0.0
        %997 = vmatpush1.msra.mxu0 0.0
        %998 = vmatprep.subr.mxu0 0.0
        %999 = vmatpush1.msra.mxu0 0.0
        %1000 = vmatprep.subr.mxu0 0.0
        %1001 = vmatpush1.msra.mxu0 0.0
        %1002 = vmatprep.subr.mxu0 0.0
        %1003 = vmatpush1.msra.mxu0 0.0
        %1004 = vmatprep.mubr.f32.mxu0 0.0
        %1005 = vmatmul.mubr.f32.gmra.mrb[0].mxu0 %v840
        %v1006 = vpop.f32.mrb[0].mxu0
        %v1007 = vadd.f32 %v821, %v1006
        %v1008 = vpop.f32.mrb[0].mxu0
        %v1009 = vadd.f32 %v821, %v1008
        %1010 = vmatprep.mubr.f32.mxu0 0.0
        %1011 = vmatmul.mubr.f32.gmra.mrb[0].mxu0 %v843
        %v1012 = vpop.f32.mrb[0].mxu0
        %v1013 = vadd.f32 %v826, %v1012
        %v1014 = vpop.f32.mrb[0].mxu0
        %v1015 = vadd.f32 %v826, %v1014
        %1016 = vmatprep.mubr.f32.mxu0 0.0
        %1017 = vmatmul.mubr.f32.gmra.mrb[0].mxu0 %v846
        %v1018 = vpop.f32.mrb[0].mxu0
        %v1019 = vadd.f32 %v831, %v1018
        %v1020 = vpop.f32.mrb[0].mxu0
        %v1021 = vadd.f32 %v831, %v1020
        %1022 = vmatprep.mubr.f32.mxu0 0.0
        %1023 = vmatmul.mubr.f32.gmra.mrb[0].mxu0 %v849
        %v1024 = vpop.f32.mrb[0].mxu0
        %v1025 = vadd.f32 %v836, %v1024
        %v1026 = vpop.f32.mrb[0].mxu0
        %v1027 = vadd.f32 %v836, %v1026
        %1028 = vdwg.mxu0
        %1029 = vmatprep.subr.mxu0 %v783
        %1030 = vmatpush1.msra.mxu0 %v782
        %1031 = vmatprep.subr.mxu0 %v791
        %1032 = vmatpush1.msra.mxu0 %v790
        %1033 = vmatprep.subr.mxu0 %v799
        %1034 = vmatpush1.msra.mxu0 %v798
        %1035 = vmatprep.subr.mxu0 %v807
        %1036 = vmatpush1.msra.mxu0 %v806
        %1037 = vmatprep.subr.mxu0 0.0
        %1038 = vmatpush1.msra.mxu0 0.0
        %1039 = vmatprep.subr.mxu0 0.0
        %1040 = vmatpush1.msra.mxu0 0.0
        %1041 = vmatprep.subr.mxu0 0.0
        %1042 = vmatpush1.msra.mxu0 0.0
        %1043 = vmatprep.subr.mxu0 0.0
        %1044 = vmatpush1.msra.mxu0 0.0
        %1045 = vmatprep.subr.mxu0 0.0
        %1046 = vmatpush1.msra.mxu0 0.0
        %1047 = vmatprep.subr.mxu0 0.0
        %1048 = vmatpush1.msra.mxu0 0.0
        %1049 = vmatprep.subr.mxu0 0.0
        %1050 = vmatpush1.msra.mxu0 0.0
        %1051 = vmatprep.subr.mxu0 0.0
        %1052 = vmatpush1.msra.mxu0 0.0
        %1053 = vmatprep.subr.mxu0 0.0
        %1054 = vmatpush1.msra.mxu0 0.0
        %1055 = vmatprep.subr.mxu0 0.0
        %1056 = vmatpush1.msra.mxu0 0.0
        %1057 = vmatprep.subr.mxu0 0.0
        %1058 = vmatpush1.msra.mxu0 0.0
        %1059 = vmatprep.subr.mxu0 0.0
        %1060 = vmatpush1.msra.mxu0 0.0
        %1061 = vmatprep.subr.mxu0 0.0
        %1062 = vmatpush1.msra.mxu0 0.0
        %1063 = vmatprep.subr.mxu0 0.0
        %1064 = vmatpush1.msra.mxu0 0.0
        %1065 = vmatprep.subr.mxu0 0.0
        %1066 = vmatpush1.msra.mxu0 0.0
        %1067 = vmatprep.subr.mxu0 0.0
        %1068 = vmatpush1.msra.mxu0 0.0
        %1069 = vmatprep.subr.mxu0 0.0
        %1070 = vmatpush1.msra.mxu0 0.0
        %1071 = vmatprep.subr.mxu0 0.0
        %1072 = vmatpush1.msra.mxu0 0.0
        %1073 = vmatprep.subr.mxu0 0.0
        %1074 = vmatpush1.msra.mxu0 0.0
        %1075 = vmatprep.subr.mxu0 0.0
        %1076 = vmatpush1.msra.mxu0 0.0
        %1077 = vmatprep.subr.mxu0 0.0
        %1078 = vmatpush1.msra.mxu0 0.0
        %1079 = vmatprep.subr.mxu0 0.0
        %1080 = vmatpush1.msra.mxu0 0.0
        %1081 = vmatprep.subr.mxu0 0.0
        %1082 = vmatpush1.msra.mxu0 0.0
        %1083 = vmatprep.subr.mxu0 0.0
        %1084 = vmatpush1.msra.mxu0 0.0
        %1085 = vmatprep.subr.mxu0 0.0
        %1086 = vmatpush1.msra.mxu0 0.0
        %1087 = vmatprep.subr.mxu0 0.0
        %1088 = vmatpush1.msra.mxu0 0.0
        %1089 = vmatprep.subr.mxu0 0.0
        %1090 = vmatpush1.msra.mxu0 0.0
        %1091 = vmatprep.subr.mxu0 0.0
        %1092 = vmatpush1.msra.mxu0 0.0
        %1093 = vmatprep.mubr.f32.mxu0 0.0
        %1094 = vmatmul.mubr.f32.gmra.mrb[0].mxu0 %v840
        %v1095 = vpop.f32.mrb[0].mxu0
        %v1096 = vadd.f32 %v821, %v1095
        %v1097 = vpop.f32.mrb[0].mxu0
        %v1098 = vadd.f32 %v821, %v1097
        %1099 = vmatprep.mubr.f32.mxu0 0.0
        %1100 = vmatmul.mubr.f32.gmra.mrb[0].mxu0 %v843
        %v1101 = vpop.f32.mrb[0].mxu0
        %v1102 = vadd.f32 %v826, %v1101
        %v1103 = vpop.f32.mrb[0].mxu0
        %v1104 = vadd.f32 %v826, %v1103
        %1105 = vmatprep.mubr.f32.mxu0 0.0
        %1106 = vmatmul.mubr.f32.gmra.mrb[0].mxu0 %v846
        %v1107 = vpop.f32.mrb[0].mxu0
        %v1108 = vadd.f32 %v831, %v1107
        %v1109 = vpop.f32.mrb[0].mxu0
        %v1110 = vadd.f32 %v831, %v1109
        %1111 = vmatprep.mubr.f32.mxu0 0.0
        %1112 = vmatmul.mubr.f32.gmra.mrb[0].mxu0 %v849
        %v1113 = vpop.f32.mrb[0].mxu0
        %v1114 = vadd.f32 %v836, %v1113
        %v1115 = vpop.f32.mrb[0].mxu0
        %v1116 = vadd.f32 %v836, %v1115
        %1117 = vdwg.mxu0
        %1118 = vmatprep.subr.mxu0 %v785
        %1119 = vmatpush1.msra.mxu0 %v784
        %1120 = vmatprep.subr.mxu0 %v793
        %1121 = vmatpush1.msra.mxu0 %v792
        %1122 = vmatprep.subr.mxu0 %v801
        %1123 = vmatpush1.msra.mxu0 %v800
        %1124 = vmatprep.subr.mxu0 %v809
        %1125 = vmatpush1.msra.mxu0 %v808
        %1126 = vmatprep.subr.mxu0 0.0
        %1127 = vmatpush1.msra.mxu0 0.0
        %1128 = vmatprep.subr.mxu0 0.0
        %1129 = vmatpush1.msra.mxu0 0.0
        %1130 = vmatprep.subr.mxu0 0.0
        %1131 = vmatpush1.msra.mxu0 0.0
        %1132 = vmatprep.subr.mxu0 0.0
        %1133 = vmatpush1.msra.mxu0 0.0
        %1134 = vmatprep.subr.mxu0 0.0
        %1135 = vmatpush1.msra.mxu0 0.0
        %1136 = vmatprep.subr.mxu0 0.0
        %1137 = vmatpush1.msra.mxu0 0.0
        %1138 = vmatprep.subr.mxu0 0.0
        %1139 = vmatpush1.msra.mxu0 0.0
        %1140 = vmatprep.subr.mxu0 0.0
        %1141 = vmatpush1.msra.mxu0 0.0
        %1142 = vmatprep.subr.mxu0 0.0
        %1143 = vmatpush1.msra.mxu0 0.0
        %1144 = vmatprep.subr.mxu0 0.0
        %1145 = vmatpush1.msra.mxu0 0.0
        %1146 = vmatprep.subr.mxu0 0.0
        %1147 = vmatpush1.msra.mxu0 0.0
        %1148 = vmatprep.subr.mxu0 0.0
        %1149 = vmatpush1.msra.mxu0 0.0
        %1150 = vmatprep.subr.mxu0 0.0
        %1151 = vmatpush1.msra.mxu0 0.0
        %1152 = vmatprep.subr.mxu0 0.0
        %1153 = vmatpush1.msra.mxu0 0.0
        %1154 = vmatprep.subr.mxu0 0.0
        %1155 = vmatpush1.msra.mxu0 0.0
        %1156 = vmatprep.subr.mxu0 0.0
        %1157 = vmatpush1.msra.mxu0 0.0
        %1158 = vmatprep.subr.mxu0 0.0
        %1159 = vmatpush1.msra.mxu0 0.0
        %1160 = vmatprep.subr.mxu0 0.0
        %1161 = vmatpush1.msra.mxu0 0.0
        %1162 = vmatprep.subr.mxu0 0.0
        %1163 = vmatpush1.msra.mxu0 0.0
        %1164 = vmatprep.subr.mxu0 0.0
        %1165 = vmatpush1.msra.mxu0 0.0
        %1166 = vmatprep.subr.mxu0 0.0
        %1167 = vmatpush1.msra.mxu0 0.0
        %1168 = vmatprep.subr.mxu0 0.0
        %1169 = vmatpush1.msra.mxu0 0.0
        %1170 = vmatprep.subr.mxu0 0.0
        %1171 = vmatpush1.msra.mxu0 0.0
        %1172 = vmatprep.subr.mxu0 0.0
        %1173 = vmatpush1.msra.mxu0 0.0
        %1174 = vmatprep.subr.mxu0 0.0
        %1175 = vmatpush1.msra.mxu0 0.0
        %1176 = vmatprep.subr.mxu0 0.0
        %1177 = vmatpush1.msra.mxu0 0.0
        %1178 = vmatprep.subr.mxu0 0.0
        %1179 = vmatpush1.msra.mxu0 0.0
        %1180 = vmatprep.subr.mxu0 0.0
        %1181 = vmatpush1.msra.mxu0 0.0
        %1182 = vmatprep.mubr.f32.mxu0 0.0
        %1183 = vmatmul.mubr.f32.gmra.mrb[0].mxu0 %v840
        %v1184 = vpop.f32.mrb[0].mxu0
        %v1185 = vadd.f32 %v821, %v1184
        %v1186 = vpop.f32.mrb[0].mxu0
        %v1187 = vadd.f32 %v821, %v1186
        %1188 = vmatprep.mubr.f32.mxu0 0.0
        %1189 = vmatmul.mubr.f32.gmra.mrb[0].mxu0 %v843
        %v1190 = vpop.f32.mrb[0].mxu0
        %v1191 = vadd.f32 %v826, %v1190
        %v1192 = vpop.f32.mrb[0].mxu0
        %v1193 = vadd.f32 %v826, %v1192
        %1194 = vmatprep.mubr.f32.mxu0 0.0
        %1195 = vmatmul.mubr.f32.gmra.mrb[0].mxu0 %v846
        %v1196 = vpop.f32.mrb[0].mxu0
        %v1197 = vadd.f32 %v831, %v1196
        %v1198 = vpop.f32.mrb[0].mxu0
        %v1199 = vadd.f32 %v831, %v1198
        %1200 = vmatprep.mubr.f32.mxu0 0.0
        %1201 = vmatmul.mubr.f32.gmra.mrb[0].mxu0 %v849
        %v1202 = vpop.f32.mrb[0].mxu0
        %v1203 = vadd.f32 %v836, %v1202
        %v1204 = vpop.f32.mrb[0].mxu0
        %v1205 = vadd.f32 %v836, %v1204
        %1206 = vdwg.mxu0
        %v1207 = vtanh.pop %v918
        %v1208 = vtanh.pop %v920
        %v1209 = vtanh.pop %v1007
        %v1210 = vtanh.pop %v1009
        %v1211 = vtanh.pop %v1096
        %v1212 = vtanh.pop %v1098
        %v1213 = vtanh.pop %v1185
        %v1214 = vtanh.pop %v1187
        %v1215 = vtanh.pop %v924
        %v1216 = vtanh.pop %v926
        %v1217 = vtanh.pop %v1013
        %v1218 = vtanh.pop %v1015
        %v1219 = vtanh.pop %v1102
        %v1220 = vtanh.pop %v1104
        %v1221 = vtanh.pop %v1191
        %v1222 = vtanh.pop %v1193
        %v1223 = vtanh.pop %v930
        %v1224 = vtanh.pop %v932
        %v1225 = vtanh.pop %v1019
        %v1226 = vtanh.pop %v1021
        %v1227 = vtanh.pop %v1108
        %v1228 = vtanh.pop %v1110
        %v1229 = vtanh.pop %v1197
        %v1230 = vtanh.pop %v1199
        %v1231 = vtanh.pop %v936
        %v1232 = vtanh.pop %v938
        %v1233 = vtanh.pop %v1025
        %v1234 = vtanh.pop %v1027
        %v1235 = vtanh.pop %v1114
        %v1236 = vtanh.pop %v1116
        %v1237 = vtanh.pop %v1203
        %v1238 = vtanh.pop %v1205
        %v1239 = vld [vmem:[%s5] sm:$0x1]
        %v1240 = vld [vmem:[#allocation2] sm:$0x1]
        %1242 = vset.pattern.permute.xlu0 0
        %1243 = vperm.xlu0 %1242, %v1240
        %v1244 = vpop.permute.xlu0 %1243
        %v1246 = vlaneseq
        %v1247 = vshrl.u32 %v1246, 7
        %v1248 = vsub.s32 0, %v1247
        %v1249 = vrot.slane %v1244, %v1248
        %v1251 = vsel %vm838, %v1239, 0
        %1253 = vmatprep.subr.mxu0 %v1208
        %1254 = vmatpush1.msra.mxu0 %v1207
        %1255 = vmatprep.subr.mxu0 %v1216
        %1256 = vmatpush1.msra.mxu0 %v1215
        %1257 = vmatprep.subr.mxu0 %v1224
        %1258 = vmatpush1.msra.mxu0 %v1223
        %1259 = vmatprep.subr.mxu0 %v1232
        %1260 = vmatpush1.msra.mxu0 %v1231
        %1261 = vmatprep.subr.mxu0 0.0
        %1262 = vmatpush1.msra.mxu0 0.0
        %1263 = vmatprep.subr.mxu0 0.0
        %1264 = vmatpush1.msra.mxu0 0.0
        %1265 = vmatprep.subr.mxu0 0.0
        %1266 = vmatpush1.msra.mxu0 0.0
        %1267 = vmatprep.subr.mxu0 0.0
        %1268 = vmatpush1.msra.mxu0 0.0
        %1269 = vmatprep.subr.mxu0 0.0
        %1270 = vmatpush1.msra.mxu0 0.0
        %1271 = vmatprep.subr.mxu0 0.0
        %1272 = vmatpush1.msra.mxu0 0.0
        %1273 = vmatprep.subr.mxu0 0.0
        %1274 = vmatpush1.msra.mxu0 0.0
        %1275 = vmatprep.subr.mxu0 0.0
        %1276 = vmatpush1.msra.mxu0 0.0
        %1277 = vmatprep.subr.mxu0 0.0
        %1278 = vmatpush1.msra.mxu0 0.0
        %1279 = vmatprep.subr.mxu0 0.0
        %1280 = vmatpush1.msra.mxu0 0.0
        %1281 = vmatprep.subr.mxu0 0.0
        %1282 = vmatpush1.msra.mxu0 0.0
        %1283 = vmatprep.subr.mxu0 0.0
        %1284 = vmatpush1.msra.mxu0 0.0
        %1285 = vmatprep.subr.mxu0 0.0
        %1286 = vmatpush1.msra.mxu0 0.0
        %1287 = vmatprep.subr.mxu0 0.0
        %1288 = vmatpush1.msra.mxu0 0.0
        %1289 = vmatprep.subr.mxu0 0.0
        %1290 = vmatpush1.msra.mxu0 0.0
        %1291 = vmatprep.subr.mxu0 0.0
        %1292 = vmatpush1.msra.mxu0 0.0
        %1293 = vmatprep.subr.mxu0 0.0
        %1294 = vmatpush1.msra.mxu0 0.0
        %1295 = vmatprep.subr.mxu0 0.0
        %1296 = vmatpush1.msra.mxu0 0.0
        %1297 = vmatprep.subr.mxu0 0.0
        %1298 = vmatpush1.msra.mxu0 0.0
        %1299 = vmatprep.subr.mxu0 0.0
        %1300 = vmatpush1.msra.mxu0 0.0
        %1301 = vmatprep.subr.mxu0 0.0
        %1302 = vmatpush1.msra.mxu0 0.0
        %1303 = vmatprep.subr.mxu0 0.0
        %1304 = vmatpush1.msra.mxu0 0.0
        %1305 = vmatprep.subr.mxu0 0.0
        %1306 = vmatpush1.msra.mxu0 0.0
        %1307 = vmatprep.subr.mxu0 0.0
        %1308 = vmatpush1.msra.mxu0 0.0
        %1309 = vmatprep.subr.mxu0 0.0
        %1310 = vmatpush1.msra.mxu0 0.0
        %1311 = vmatprep.subr.mxu0 0.0
        %1312 = vmatpush1.msra.mxu0 0.0
        %1313 = vmatprep.subr.mxu0 0.0
        %1314 = vmatpush1.msra.mxu0 0.0
        %1315 = vmatprep.subr.mxu0 0.0
        %1316 = vmatpush1.msra.mxu0 0.0
        %1317 = vmatprep.mubr.f32.mxu0 0.0
        %1318 = vmatmul.mubr.f32.gmra.mrb[0].mxu0 %v1251
        %v1319 = vpop.f32.mrb[0].mxu0
        %v1320 = vadd.f32 %v1249, %v1319
        %v1321 = vpop.f32.mrb[0].mxu0
        %v1322 = vadd.f32 %v1249, %v1321
        %1323 = vdwg.mxu0
        %1324 = vmatprep.subr.mxu0 %v1210
        %1325 = vmatpush1.msra.mxu0 %v1209
        %1326 = vmatprep.subr.mxu0 %v1218
        %1327 = vmatpush1.msra.mxu0 %v1217
        %1328 = vmatprep.subr.mxu0 %v1226
        %1329 = vmatpush1.msra.mxu0 %v1225
        %1330 = vmatprep.subr.mxu0 %v1234
        %1331 = vmatpush1.msra.mxu0 %v1233
        %1332 = vmatprep.subr.mxu0 0.0
        %1333 = vmatpush1.msra.mxu0 0.0
        %1334 = vmatprep.subr.mxu0 0.0
        %1335 = vmatpush1.msra.mxu0 0.0
        %1336 = vmatprep.subr.mxu0 0.0
        %1337 = vmatpush1.msra.mxu0 0.0
        %1338 = vmatprep.subr.mxu0 0.0
        %1339 = vmatpush1.msra.mxu0 0.0
        %1340 = vmatprep.subr.mxu0 0.0
        %1341 = vmatpush1.msra.mxu0 0.0
        %1342 = vmatprep.subr.mxu0 0.0
        %1343 = vmatpush1.msra.mxu0 0.0
        %1344 = vmatprep.subr.mxu0 0.0
        %1345 = vmatpush1.msra.mxu0 0.0
        %1346 = vmatprep.subr.mxu0 0.0
        %1347 = vmatpush1.msra.mxu0 0.0
        %1348 = vmatprep.subr.mxu0 0.0
        %1349 = vmatpush1.msra.mxu0 0.0
        %1350 = vmatprep.subr.mxu0 0.0
        %1351 = vmatpush1.msra.mxu0 0.0
        %1352 = vmatprep.subr.mxu0 0.0
        %1353 = vmatpush1.msra.mxu0 0.0
        %1354 = vmatprep.subr.mxu0 0.0
        %1355 = vmatpush1.msra.mxu0 0.0
        %1356 = vmatprep.subr.mxu0 0.0
        %1357 = vmatpush1.msra.mxu0 0.0
        %1358 = vmatprep.subr.mxu0 0.0
        %1359 = vmatpush1.msra.mxu0 0.0
        %1360 = vmatprep.subr.mxu0 0.0
        %1361 = vmatpush1.msra.mxu0 0.0
        %1362 = vmatprep.subr.mxu0 0.0
        %1363 = vmatpush1.msra.mxu0 0.0
        %1364 = vmatprep.subr.mxu0 0.0
        %1365 = vmatpush1.msra.mxu0 0.0
        %1366 = vmatprep.subr.mxu0 0.0
        %1367 = vmatpush1.msra.mxu0 0.0
        %1368 = vmatprep.subr.mxu0 0.0
        %1369 = vmatpush1.msra.mxu0 0.0
        %1370 = vmatprep.subr.mxu0 0.0
        %1371 = vmatpush1.msra.mxu0 0.0
        %1372 = vmatprep.subr.mxu0 0.0
        %1373 = vmatpush1.msra.mxu0 0.0
        %1374 = vmatprep.subr.mxu0 0.0
        %1375 = vmatpush1.msra.mxu0 0.0
        %1376 = vmatprep.subr.mxu0 0.0
        %1377 = vmatpush1.msra.mxu0 0.0
        %1378 = vmatprep.subr.mxu0 0.0
        %1379 = vmatpush1.msra.mxu0 0.0
        %1380 = vmatprep.subr.mxu0 0.0
        %1381 = vmatpush1.msra.mxu0 0.0
        %1382 = vmatprep.subr.mxu0 0.0
        %1383 = vmatpush1.msra.mxu0 0.0
        %1384 = vmatprep.subr.mxu0 0.0
        %1385 = vmatpush1.msra.mxu0 0.0
        %1386 = vmatprep.subr.mxu0 0.0
        %1387 = vmatpush1.msra.mxu0 0.0
        %1388 = vmatprep.mubr.f32.mxu0 0.0
        %1389 = vmatmul.mubr.f32.gmra.mrb[0].mxu0 %v1251
        %v1390 = vpop.f32.mrb[0].mxu0
        %v1391 = vadd.f32 %v1249, %v1390
        %v1392 = vpop.f32.mrb[0].mxu0
        %v1393 = vadd.f32 %v1249, %v1392
        %1394 = vdwg.mxu0
        %1395 = vmatprep.subr.mxu0 %v1212
        %1396 = vmatpush1.msra.mxu0 %v1211
        %1397 = vmatprep.subr.mxu0 %v1220
        %1398 = vmatpush1.msra.mxu0 %v1219
        %1399 = vmatprep.subr.mxu0 %v1228
        %1400 = vmatpush1.msra.mxu0 %v1227
        %1401 = vmatprep.subr.mxu0 %v1236
        %1402 = vmatpush1.msra.mxu0 %v1235
        %1403 = vmatprep.subr.mxu0 0.0
        %1404 = vmatpush1.msra.mxu0 0.0
        %1405 = vmatprep.subr.mxu0 0.0
        %1406 = vmatpush1.msra.mxu0 0.0
        %1407 = vmatprep.subr.mxu0 0.0
        %1408 = vmatpush1.msra.mxu0 0.0
        %1409 = vmatprep.subr.mxu0 0.0
        %1410 = vmatpush1.msra.mxu0 0.0
        %1411 = vmatprep.subr.mxu0 0.0
        %1412 = vmatpush1.msra.mxu0 0.0
        %1413 = vmatprep.subr.mxu0 0.0
        %1414 = vmatpush1.msra.mxu0 0.0
        %1415 = vmatprep.subr.mxu0 0.0
        %1416 = vmatpush1.msra.mxu0 0.0
        %1417 = vmatprep.subr.mxu0 0.0
        %1418 = vmatpush1.msra.mxu0 0.0
        %1419 = vmatprep.subr.mxu0 0.0
        %1420 = vmatpush1.msra.mxu0 0.0
        %1421 = vmatprep.subr.mxu0 0.0
        %1422 = vmatpush1.msra.mxu0 0.0
        %1423 = vmatprep.subr.mxu0 0.0
        %1424 = vmatpush1.msra.mxu0 0.0
        %1425 = vmatprep.subr.mxu0 0.0
        %1426 = vmatpush1.msra.mxu0 0.0
        %1427 = vmatprep.subr.mxu0 0.0
        %1428 = vmatpush1.msra.mxu0 0.0
        %1429 = vmatprep.subr.mxu0 0.0
        %1430 = vmatpush1.msra.mxu0 0.0
        %1431 = vmatprep.subr.mxu0 0.0
        %1432 = vmatpush1.msra.mxu0 0.0
        %1433 = vmatprep.subr.mxu0 0.0
        %1434 = vmatpush1.msra.mxu0 0.0
        %1435 = vmatprep.subr.mxu0 0.0
        %1436 = vmatpush1.msra.mxu0 0.0
        %1437 = vmatprep.subr.mxu0 0.0
        %1438 = vmatpush1.msra.mxu0 0.0
        %1439 = vmatprep.subr.mxu0 0.0
        %1440 = vmatpush1.msra.mxu0 0.0
        %1441 = vmatprep.subr.mxu0 0.0
        %1442 = vmatpush1.msra.mxu0 0.0
        %1443 = vmatprep.subr.mxu0 0.0
        %1444 = vmatpush1.msra.mxu0 0.0
        %1445 = vmatprep.subr.mxu0 0.0
        %1446 = vmatpush1.msra.mxu0 0.0
        %1447 = vmatprep.subr.mxu0 0.0
        %1448 = vmatpush1.msra.mxu0 0.0
        %1449 = vmatprep.subr.mxu0 0.0
        %1450 = vmatpush1.msra.mxu0 0.0
        %1451 = vmatprep.subr.mxu0 0.0
        %1452 = vmatpush1.msra.mxu0 0.0
        %1453 = vmatprep.subr.mxu0 0.0
        %1454 = vmatpush1.msra.mxu0 0.0
        %1455 = vmatprep.subr.mxu0 0.0
        %1456 = vmatpush1.msra.mxu0 0.0
        %1457 = vmatprep.subr.mxu0 0.0
        %1458 = vmatpush1.msra.mxu0 0.0
        %1459 = vmatprep.mubr.f32.mxu0 0.0
        %1460 = vmatmul.mubr.f32.gmra.mrb[0].mxu0 %v1251
        %v1461 = vpop.f32.mrb[0].mxu0
        %v1462 = vadd.f32 %v1249, %v1461
        %v1463 = vpop.f32.mrb[0].mxu0
        %v1464 = vadd.f32 %v1249, %v1463
        %1465 = vdwg.mxu0
        %1466 = vmatprep.subr.mxu0 %v1214
        %1467 = vmatpush1.msra.mxu0 %v1213
        %1468 = vmatprep.subr.mxu0 %v1222
        %1469 = vmatpush1.msra.mxu0 %v1221
        %1470 = vmatprep.subr.mxu0 %v1230
        %1471 = vmatpush1.msra.mxu0 %v1229
        %1472 = vmatprep.subr.mxu0 %v1238
        %1473 = vmatpush1.msra.mxu0 %v1237
        %1474 = vmatprep.subr.mxu0 0.0
        %1475 = vmatpush1.msra.mxu0 0.0
        %1476 = vmatprep.subr.mxu0 0.0
        %1477 = vmatpush1.msra.mxu0 0.0
        %1478 = vmatprep.subr.mxu0 0.0
        %1479 = vmatpush1.msra.mxu0 0.0
        %1480 = vmatprep.subr.mxu0 0.0
        %1481 = vmatpush1.msra.mxu0 0.0
        %1482 = vmatprep.subr.mxu0 0.0
        %1483 = vmatpush1.msra.mxu0 0.0
        %1484 = vmatprep.subr.mxu0 0.0
        %1485 = vmatpush1.msra.mxu0 0.0
        %1486 = vmatprep.subr.mxu0 0.0
        %1487 = vmatpush1.msra.mxu0 0.0
        %1488 = vmatprep.subr.mxu0 0.0
        %1489 = vmatpush1.msra.mxu0 0.0
        %1490 = vmatprep.subr.mxu0 0.0
        %1491 = vmatpush1.msra.mxu0 0.0
        %1492 = vmatprep.subr.mxu0 0.0
        %1493 = vmatpush1.msra.mxu0 0.0
        %1494 = vmatprep.subr.mxu0 0.0
        %1495 = vmatpush1.msra.mxu0 0.0
        %1496 = vmatprep.subr.mxu0 0.0
        %1497 = vmatpush1.msra.mxu0 0.0
        %1498 = vmatprep.subr.mxu0 0.0
        %1499 = vmatpush1.msra.mxu0 0.0
        %1500 = vmatprep.subr.mxu0 0.0
        %1501 = vmatpush1.msra.mxu0 0.0
        %1502 = vmatprep.subr.mxu0 0.0
        %1503 = vmatpush1.msra.mxu0 0.0
        %1504 = vmatprep.subr.mxu0 0.0
        %1505 = vmatpush1.msra.mxu0 0.0
        %1506 = vmatprep.subr.mxu0 0.0
        %1507 = vmatpush1.msra.mxu0 0.0
        %1508 = vmatprep.subr.mxu0 0.0
        %1509 = vmatpush1.msra.mxu0 0.0
        %1510 = vmatprep.subr.mxu0 0.0
        %1511 = vmatpush1.msra.mxu0 0.0
        %1512 = vmatprep.subr.mxu0 0.0
        %1513 = vmatpush1.msra.mxu0 0.0
        %1514 = vmatprep.subr.mxu0 0.0
        %1515 = vmatpush1.msra.mxu0 0.0
        %1516 = vmatprep.subr.mxu0 0.0
        %1517 = vmatpush1.msra.mxu0 0.0
        %1518 = vmatprep.subr.mxu0 0.0
        %1519 = vmatpush1.msra.mxu0 0.0
        %1520 = vmatprep.subr.mxu0 0.0
        %1521 = vmatpush1.msra.mxu0 0.0
        %1522 = vmatprep.subr.mxu0 0.0
        %1523 = vmatpush1.msra.mxu0 0.0
        %1524 = vmatprep.subr.mxu0 0.0
        %1525 = vmatpush1.msra.mxu0 0.0
        %1526 = vmatprep.subr.mxu0 0.0
        %1527 = vmatpush1.msra.mxu0 0.0
        %1528 = vmatprep.subr.mxu0 0.0
        %1529 = vmatpush1.msra.mxu0 0.0
        %1530 = vmatprep.mubr.f32.mxu0 0.0
        %1531 = vmatmul.mubr.f32.gmra.mrb[0].mxu0 %v1251
        %v1532 = vpop.f32.mrb[0].mxu0
        %v1533 = vadd.f32 %v1249, %v1532
        %v1534 = vpop.f32.mrb[0].mxu0
        %v1535 = vadd.f32 %v1249, %v1534
        %1536 = vdwg.mxu0
        %v1545 = vcombine.low %v1320, %v1322
        %v1546 = vcombine.low %v1391, %v1393
        %v1547 = vcombine.low %v1462, %v1464
        %v1548 = vcombine.low %v1533, %v1535
        %v1550 = vunpack.c.l.s4 1966171168
        %v1551 = vunpack.c.0.s8 %v1550
        %v1552 = vlaneseq
        %v1553 = vshrl.u32 %v1552, 7
        %v1554 = vsub.s32 %v1551, %v1553
        %v1555 = vrot.slane %v1545, %v1554
        %v1557 = vunpack.c.l.s4 1966171168
        %v1558 = vunpack.c.0.s8 %v1557
        %v1559 = vlaneseq
        %v1560 = vshrl.u32 %v1559, 7
        %v1561 = vsub.s32 %v1558, %v1560
        %v1562 = vrot.slane %v1546, %v1561
        %v1564 = vunpack.c.l.s4 1966171168
        %v1565 = vunpack.c.0.s8 %v1564
        %v1566 = vlaneseq
        %v1567 = vshrl.u32 %v1566, 7
        %v1568 = vsub.s32 %v1565, %v1567
        %v1569 = vrot.slane %v1547, %v1568
        %v1571 = vunpack.c.l.s4 1966171168
        %v1572 = vunpack.c.0.s8 %v1571
        %v1573 = vlaneseq
        %v1574 = vshrl.u32 %v1573, 7
        %v1575 = vsub.s32 %v1572, %v1574
        %v1576 = vrot.slane %v1548, %v1575
        %v1577 = vcombine.low %v1555, %v1562
        %v1578 = vcombine.low %v1569, %v1576
        %v1580 = vunpack.c.l.s4 1966171168
        %v1581 = vunpack.c.0.s8 %v1580
        %v1582 = vlaneseq
        %v1583 = vshrl.u32 %v1582, 7
        %v1584 = vsub.s32 %v1581, %v1583
        %v1585 = vrot.slane %v1577, %v1584
        %v1587 = vunpack.c.l.s4 1966171168
        %v1588 = vunpack.c.0.s8 %v1587
        %v1589 = vlaneseq
        %v1590 = vshrl.u32 %v1589, 7
        %v1591 = vsub.s32 %v1588, %v1590
        %v1592 = vrot.slane %v1578, %v1591
        %v1593 = vcombine.low %v1585, %v1592
        %1595 = vst [vmem:[%s274] sm:$0xff] %v1593
        %s1596 = sand.u32 %s183, 1
        %s1597 = scalar_lea.sflag [#allocation4], %s1596
        %s1598 = sand.u32 %s183, 1
        %s1599 = smul.addr %s1598, 8
        %s1600 = scalar_lea.vmem [#allocation3], %s1599
        // Predicated region
        $region49: #{tpu_custom_call.1} parent=47 // pred_check
          %p1601 = pneg %p193
        $region50: #{tpu_custom_call.1} parent=47 // pred_check_branch
          %1603 = sbr.rel (%p1601) target = $region52
        $region51: #{tpu_custom_call.1} parent=47 // pred_region
          %s1604 = smul.u32 8, %s23
          %s1606 = ssub.s32 128, 128
          %1607 = vsyncadd %s1597, %s1606
          %s1608 = smul.addr %s1604, 16
          %s1609 = scalar_lea.hbm %s7, %s1608
          %s1611 = sshll.u32 %s1600, 4
          %s1612 = int_to_ptr.vmem [resolvable:$true] %s1611
          %1614 = dma.vmem_to_hbm [thread:$0]  %s1612, 128, %s1609, %s1597
        $region52: #{tpu_custom_call.1} parent=47 // pred_fallthru
          _
      $region48: #{tpu_custom_call.1} parent=5 // pred_fallthru
        _
      %p1615 = scmp.le.s32.totalorder 2, %s18
      // Predicated region
      $region53: #{tpu_custom_call.1} parent=5 // pred_check
        %p1616 = pneg %p1615
      $region54: #{tpu_custom_call.1} parent=5 // pred_check_branch
        %1618 = sbr.rel (%p1616) target = $region56
      $region55: #{tpu_custom_call.1} parent=5 // pred_region
        %s1619 = ssub.s32 %s18, 2
        // Predicated region
        $region57: #{tpu_custom_call.1} parent=55 // pred_check
          %p1620 = pneg %p199
        $region58: #{tpu_custom_call.1} parent=55 // pred_check_branch
          %1622 = sbr.rel (%p1620) target = $region60
        $region59: #{tpu_custom_call.1} parent=55 // pred_region
          %s1623 = sand.u32 %s184, 1
          %s1624 = scalar_lea.sflag [#allocation4], %s1623
          %s1625 = sand.u32 %s184, 1
          %s1626 = smul.addr %s1625, 8
          %s1627 = scalar_lea.vmem [#allocation3], %s1626
          %1628 = dma.done %s1624, 128
        $region60: #{tpu_custom_call.1} parent=55 // pred_fallthru
          _
      $region56: #{tpu_custom_call.1} parent=5 // pred_fallthru
        _
    $region6: #{tpu_custom_call.1} parent=1 // loop_footer
      %s22 = sadd.s32 1, %s18
    $region7: #{tpu_custom_call.1} parent=1 // loop_footer_branch
      %17 = sbr.rel target = $region3
    $region8: #{tpu_custom_call.1} parent=1 // loop_exit
      _
    %1629 = vsyncpa [#allocation4], 1
    %s1630 = scalar_lea.sflag [#allocation4], 1
    %1631 = vsyncpa %s1630, 1

</llo_original>
